<compile_context>
chip_gen: v6e
topology: v6e:2x2x1
jax: 0.10.0
libtpu: 0.0.40
codegen_flags: <defaults>
</compile_context>

<pallas_src>
import functools
import math

import jax
import jax.numpy as jnp
from jax.experimental import pallas as pl
from jax.experimental.pallas import tpu as pltpu


def _round_up(x, m):
    return ((x + m - 1) // m) * m


def _make_conv3d_kernel(TD, H, W, KD, KH, KW, dil):
    """Kernel body: full im2col over the (KD,KH,KW) taps -> one MXU matmul."""

    def kernel(x_ref, w_ref, b_ref, o_ref):
        # x_ref: (1, TD + dil*(KD-1), H + dil*(KH-1), W + dil*(KW-1), Cinp)
        # w_ref: (KD*KH*KW*Cinp, Coutp)
        # b_ref: (1, Coutp) float32
        # o_ref: (1, TD, H, W, Coutp)
        coutp = o_ref.shape[-1]
        x = x_ref[0]

        # Fold the KW taps into the lane (contraction) dimension once per grid
        # step -- the only sublane-offset slicing -- reused by all (kd,kh) taps.
        xw = jnp.concatenate(
            [x[:, :, c * dil:c * dil + W, :] for c in range(KW)], axis=-1)
        # (TD+halo_d, H+halo_h, W, KW*Cinp)

        # Fold the KD*KH taps via cheap leading-dim slices -> im2col patch
        # whose lane order is (kd, kh, kw, cin), matching w_ref's row order.
        cols = [xw[a * dil:a * dil + TD, b * dil:b * dil + H]
                for a in range(KD) for b in range(KH)]
        patch = jnp.concatenate(cols, axis=-1) if len(cols) > 1 else cols[0]
        # (TD, H, W, KD*KH*KW*Cinp)

        k = patch.shape[-1]
        out = jnp.dot(patch.reshape(TD * H * W, k), w_ref[...],
                      preferred_element_type=jnp.float32)
        out = out + b_ref[...].astype(jnp.float32)   # (1,Coutp) broadcast
        o_ref[0] = out.reshape(TD, H, W, coutp).astype(o_ref.dtype)

    return kernel


def _auto_tile_d(D, H, W, Hp, Wp, Cinp, Coutp, KD, KH, KW, halo_d,
                 in_isz, out_isz, budget=24 * 1024 * 1024):
    """Pick TD so the per-step working set fits comfortably in VMEM.

    Accounts for: double-buffered input block + the loaded copy, the KW-folded
    intermediate, the full im2col patch (dominant: KD*KH*KW x input), the f32
    matmul result, the double-buffered output block and the resident weights.
    Budget leaves headroom vs. the 48 MiB scoped request (v7x: 64 MiB phys).
    """
    kvol = KD * KH * KW
    per_row = (
        3 * Hp * Wp * Cinp * in_isz          # 2x pipelined input + loaded copy
        + Hp * W * KW * Cinp * in_isz        # KW-folded intermediate
        + H * W * kvol * Cinp * in_isz       # im2col patch (dominant term)
        + H * W * Coutp * 4                  # f32 matmul result
        + 2 * H * W * Coutp * out_isz        # 2x pipelined output block
    )
    fixed = (
        3 * halo_d * Hp * Wp * Cinp * in_isz     # halo rows of the input slab
        + halo_d * Hp * W * KW * Cinp * in_isz   # halo rows of the KW fold
        + 2 * kvol * Cinp * Coutp * in_isz       # weights (double-buffered)
        + 8 * Coutp * 4                          # bias
    )
    td = (budget - fixed) // max(1, per_row)
    return int(max(1, min(D, td)))


@functools.partial(
    jax.jit, static_argnames=("stride", "dilation", "tile_d", "compute_dtype"))
def cnn_layer3d_plain(x_ncdhw, weight_oidhw, bias, *, stride=1, dilation=1,
                      tile_d=None, compute_dtype=None):
    """Forward pass of CNNLayer3dPlain.

    x_ncdhw:      (N, Cin, D, H, W)
    weight_oidhw: (Cout, Cin, KD, KH, KW)
    bias:         (Cout,)
    returns:      (N, Cout, D, H, W)
    """
    if stride != 1:
        # TODO(synk): stride > 1 not implemented (module default is stride=1).
        raise NotImplementedError("stride != 1 not implemented")

    N, Cin, D, H, W = x_ncdhw.shape
    Cout, Cin_w, KD, KH, KW = weight_oidhw.shape
    assert Cin_w == Cin, (Cin_w, Cin)
    if (KD % 2 == 0) or (KH % 2 == 0) or (KW % 2 == 0):
        # TODO(synk): even kernel sizes need asymmetric 'same' padding.
        raise NotImplementedError("even kernel sizes not implemented")

    pad_d = dilation * (KD - 1) // 2
    pad_h = dilation * (KH - 1) // 2
    pad_w = dilation * (KW - 1) // 2
    if pad_d >= D or pad_h >= H or pad_w >= W:
        raise ValueError("reflect padding requires pad < spatial dim")

    cdt = x_ncdhw.dtype if compute_dtype is None else jnp.dtype(compute_dtype)
    odt = x_ncdhw.dtype
    Cinp = _round_up(Cin, 8)      # sublane/lane-friendly input channels
    Coutp = _round_up(Cout, 128)  # lane-dense output channels

    halo_d = dilation * (KD - 1)
    halo_h = dilation * (KH - 1)
    halo_w = dilation * (KW - 1)
    Hp, Wp = H + halo_h, W + halo_w

    # --- glue: layout change + reflect pad + channel pad (matches F.pad) ---
    x = jnp.transpose(x_ncdhw, (0, 2, 3, 4, 1))  # NDHWC
    x = jnp.pad(
        x,
        ((0, 0), (pad_d, pad_d), (pad_h, pad_h), (pad_w, pad_w), (0, 0)),
        mode="reflect")
    if Cinp > Cin:
        x = jnp.pad(x, ((0, 0),) * 4 + ((0, Cinp - Cin),))
    x = x.astype(cdt)

    in_isz = jnp.dtype(cdt).itemsize
    out_isz = jnp.dtype(odt).itemsize
    if tile_d is None:
        tile_d = _auto_tile_d(D, H, W, Hp, Wp, Cinp, Coutp, KD, KH, KW,
                              halo_d, in_isz, out_isz)
    TD = int(max(1, min(tile_d, D)))
    nD = -(-D // TD)
    D_ceil = nD * TD
    TDh = TD + halo_d

    # Pad D so every tile is full (extra output rows are sliced off below).
    extra_d = D_ceil - D
    if extra_d > 0:
        x = jnp.pad(x, ((0, 0), (0, extra_d), (0, 0), (0, 0), (0, 0)))

    # Overlapping (halo'd) D-windows, materialized in the wrapper.
    # TODO(synk): replace with in-kernel halo DMA to avoid the extra HBM copy.
    x_win = jnp.stack([x[:, i * TD:i * TD + TDh] for i in range(nD)], axis=1)
    x_win = x_win.reshape(N * nD, TDh, Hp, Wp, Cinp)

    # Weight: OIDHW -> (KD,KH,KW,Cin,Cout), zero-pad channels, flatten K dim.
    w = jnp.transpose(weight_oidhw, (2, 3, 4, 1, 0))
    w = jnp.pad(w, ((0, 0), (0, 0), (0, 0), (0, Cinp - Cin), (0, Coutp - Cout)))
    Kdim = KD * KH * KW * Cinp
    w2d = w.reshape(Kdim, Coutp).astype(cdt)
    b2 = jnp.pad(bias, (0, Coutp - Cout)).astype(jnp.float32).reshape(1, Coutp)

    kernel = _make_conv3d_kernel(TD, H, W, KD, KH, KW, dilation)

    # Advisory cost for XLA's scheduler around the custom call.
    flops = 2 * N * D * H * W * Cout * Cin * KD * KH * KW
    bytes_accessed = (x_win.size * in_isz + w2d.size * in_isz + b2.size * 4
                      + N * nD * TD * H * W * Coutp * out_isz)
    cost = pl.CostEstimate(flops=int(flops), transcendentals=0,
                           bytes_accessed=int(bytes_accessed))

    out_win = pl.pallas_call(
        kernel,
        out_shape=jax.ShapeDtypeStruct((N * nD, TD, H, W, Coutp), odt),
        grid_spec=pltpu.PrefetchScalarGridSpec(
            num_scalar_prefetch=0,
            grid=(N, nD),
            in_specs=[
                pl.BlockSpec((1, TDh, Hp, Wp, Cinp),
                             lambda n, i: (n * nD + i, 0, 0, 0, 0)),
                pl.BlockSpec((Kdim, Coutp), lambda n, i: (0, 0)),
                pl.BlockSpec((1, Coutp), lambda n, i: (0, 0)),
            ],
            out_specs=pl.BlockSpec((1, TD, H, W, Coutp),
                                   lambda n, i: (n * nD + i, 0, 0, 0, 0)),
        ),
        compiler_params=pltpu.CompilerParams(
            dimension_semantics=("parallel", "parallel"),
            vmem_limit_bytes=48 * 1024 * 1024),
        cost_estimate=cost,
    )(x_win, w2d, b2)

    out = out_win.reshape(N, D_ceil, H, W, Coutp)[:, :D, :, :, :Cout]
    return jnp.transpose(out, (0, 4, 1, 2, 3)).astype(odt)


def init_params(key, in_channels, out_channels, kernel_size, init_bias=0.0):
    """Deterministic Xavier-uniform weight + constant bias (as in the module)."""
    KD, KH, KW = kernel_size
    receptive = KD * KH * KW
    fan_in = in_channels * receptive
    fan_out = out_channels * receptive
    bound = math.sqrt(6.0 / (fan_in + fan_out))
    w = jax.random.uniform(
        key, (out_channels, in_channels, KD, KH, KW),
        minval=-bound, maxval=bound, dtype=jnp.float32)
    b = jnp.full((out_channels,), init_bias, dtype=jnp.float32)
    return w, b


def _reference(x, w, b, dilation):
    """Pure-JAX reference (reflect pad + lax conv) for correctness check."""
    KD, KH, KW = w.shape[2], w.shape[3], w.shape[4]
    pad_d = dilation * (KD - 1) // 2
    pad_h = dilation * (KH - 1) // 2
    pad_w = dilation * (KW - 1) // 2
    xp = jnp.pad(
        x,
        ((0, 0), (0, 0), (pad_d, pad_d), (pad_h, pad_h), (pad_w, pad_w)),
        mode="reflect")
    dn = jax.lax.conv_dimension_numbers(
        xp.shape, w.shape, ("NCDHW", "OIDHW", "NCDHW"))
    y = jax.lax.conv_general_dilated(
        xp, w, window_strides=(1, 1, 1), padding="VALID",
        rhs_dilation=(dilation, dilation, dilation), dimension_numbers=dn)
    return y + b.reshape(1, -1, 1, 1, 1)


if __name__ == "__main__":
    key = jax.random.PRNGKey(0)
    k_x, k_w = jax.random.split(key)

    batch, in_ch, out_ch = 2, 4, 8
    D = H = W = 8
    kernel_size = (3, 3, 3)
    dilation = 1

    x = jax.random.normal(k_x, (batch, in_ch, D, H, W), dtype=jnp.float32)
    weight, bias = init_params(k_w, in_ch, out_ch, kernel_size, init_bias=0.0)
    ref = _reference(x, weight, bias, dilation)

    # float32 path, explicit D-tiling (tight tolerance).
    out_f32 = cnn_layer3d_plain(x, weight, bias, dilation=dilation, tile_d=4)
    out_f32 = jax.block_until_ready(out_f32)
    assert out_f32.shape == (batch, out_ch, D, H, W), out_f32.shape
    assert jnp.allclose(out_f32, ref, atol=1e-4, rtol=1e-4), (
        float(jnp.max(jnp.abs(out_f32 - ref))))

    # float32 path, auto-selected D-tiling (exercises the VMEM-aware tiler).
    out_auto = cnn_layer3d_plain(x, weight, bias, dilation=dilation)
    out_auto = jax.block_until_ready(out_auto)
    assert out_auto.shape == (batch, out_ch, D, H, W), out_auto.shape
    assert jnp.allclose(out_auto, ref, atol=1e-4, rtol=1e-4), (
        float(jnp.max(jnp.abs(out_auto - ref))))

    # bf16 compute path (recommended on v6e/v7x), f32 accumulation.
    out_bf16 = cnn_layer3d_plain(x, weight, bias, dilation=dilation, tile_d=4,
                                 compute_dtype=jnp.bfloat16)
    out_bf16 = jax.block_until_ready(out_bf16)
    assert out_bf16.shape == (batch, out_ch, D, H, W), out_bf16.shape
    assert jnp.allclose(out_bf16, ref, atol=5e-2, rtol=5e-2), (
        float(jnp.max(jnp.abs(out_bf16 - ref))))

    print("KERNEL_OK")
</pallas_src>

<mosaic_0001>
module attributes {stable_mosaic.version = 11 : i64} {
  func.func @kernel(%arg0: i32, %arg1: i32, %arg2: memref<1x6x10x10x8xf32, #tpu.memory_space<vmem>>, %arg3: memref<216x128xf32, #tpu.memory_space<vmem>>, %arg4: memref<1x128xf32, #tpu.memory_space<vmem>>, %arg5: memref<1x4x8x8x128xf32, #tpu.memory_space<vmem>>) attributes {dimension_semantics = [#tpu.dimension_semantics<parallel>, #tpu.dimension_semantics<parallel>], iteration_bounds = array<i64: 2, 2>, scalar_prefetch = 0 : i64, scratch_operands = 0 : i64, tpu.core_type = #tpu.core_type<tc>, window_params = [{transform_indices = @transform_0, window_bounds = array<i64: 1, 6, 10, 10, 8>}, {pipeline_mode = #tpu.pipeline_mode<synchronous>, transform_indices = @transform_1, window_bounds = array<i64: 216, 128>}, {pipeline_mode = #tpu.pipeline_mode<synchronous>, transform_indices = @transform_2, window_bounds = array<i64: 1, 128>}, {transform_indices = @transform_3, window_bounds = array<i64: 1, 4, 8, 8, 128>}]} {
    %c0 = arith.constant 0 : index
    %c0_0 = arith.constant 0 : index
    %c0_1 = arith.constant 0 : index
    %c0_2 = arith.constant 0 : index
    %c0_3 = arith.constant 0 : index
    %0 = vector.load %arg2[%c0, %c0_0, %c0_1, %c0_2, %c0_3] : memref<1x6x10x10x8xf32, #tpu.memory_space<vmem>>, vector<1x6x10x10x8xf32>
    %1 = vector.shape_cast %0 : vector<1x6x10x10x8xf32> to vector<6x10x10x8xf32>
    %2 = vector.extract_strided_slice %1 {offsets = [0, 0, 0, 0], sizes = [6, 10, 8, 8], strides = [1, 1, 1, 1]} : vector<6x10x10x8xf32> to vector<6x10x8x8xf32>
    %3 = vector.extract_strided_slice %1 {offsets = [0, 0, 1, 0], sizes = [6, 10, 8, 8], strides = [1, 1, 1, 1]} : vector<6x10x10x8xf32> to vector<6x10x8x8xf32>
    %4 = vector.extract_strided_slice %1 {offsets = [0, 0, 2, 0], sizes = [6, 10, 8, 8], strides = [1, 1, 1, 1]} : vector<6x10x10x8xf32> to vector<6x10x8x8xf32>
    %5 = tpu.concatenate %2, %3, %4 in 3 : vector<6x10x8x8xf32>, vector<6x10x8x8xf32>, vector<6x10x8x8xf32> -> vector<6x10x8x24xf32>
    %6 = vector.extract_strided_slice %5 {offsets = [0, 0, 0, 0], sizes = [4, 8, 8, 24], strides = [1, 1, 1, 1]} : vector<6x10x8x24xf32> to vector<4x8x8x24xf32>
    %7 = vector.extract_strided_slice %5 {offsets = [0, 1, 0, 0], sizes = [4, 8, 8, 24], strides = [1, 1, 1, 1]} : vector<6x10x8x24xf32> to vector<4x8x8x24xf32>
    %8 = vector.extract_strided_slice %5 {offsets = [0, 2, 0, 0], sizes = [4, 8, 8, 24], strides = [1, 1, 1, 1]} : vector<6x10x8x24xf32> to vector<4x8x8x24xf32>
    %9 = vector.extract_strided_slice %5 {offsets = [1, 0, 0, 0], sizes = [4, 8, 8, 24], strides = [1, 1, 1, 1]} : vector<6x10x8x24xf32> to vector<4x8x8x24xf32>
    %10 = vector.extract_strided_slice %5 {offsets = [1, 1, 0, 0], sizes = [4, 8, 8, 24], strides = [1, 1, 1, 1]} : vector<6x10x8x24xf32> to vector<4x8x8x24xf32>
    %11 = vector.extract_strided_slice %5 {offsets = [1, 2, 0, 0], sizes = [4, 8, 8, 24], strides = [1, 1, 1, 1]} : vector<6x10x8x24xf32> to vector<4x8x8x24xf32>
    %12 = vector.extract_strided_slice %5 {offsets = [2, 0, 0, 0], sizes = [4, 8, 8, 24], strides = [1, 1, 1, 1]} : vector<6x10x8x24xf32> to vector<4x8x8x24xf32>
    %13 = vector.extract_strided_slice %5 {offsets = [2, 1, 0, 0], sizes = [4, 8, 8, 24], strides = [1, 1, 1, 1]} : vector<6x10x8x24xf32> to vector<4x8x8x24xf32>
    %14 = vector.extract_strided_slice %5 {offsets = [2, 2, 0, 0], sizes = [4, 8, 8, 24], strides = [1, 1, 1, 1]} : vector<6x10x8x24xf32> to vector<4x8x8x24xf32>
    %15 = tpu.concatenate %6, %7, %8, %9, %10, %11, %12, %13, %14 in 3 : vector<4x8x8x24xf32>, vector<4x8x8x24xf32>, vector<4x8x8x24xf32>, vector<4x8x8x24xf32>, vector<4x8x8x24xf32>, vector<4x8x8x24xf32>, vector<4x8x8x24xf32>, vector<4x8x8x24xf32>, vector<4x8x8x24xf32> -> vector<4x8x8x216xf32>
    %16 = vector.shape_cast %15 : vector<4x8x8x216xf32> to vector<256x216xf32>
    %c0_4 = arith.constant 0 : index
    %c0_5 = arith.constant 0 : index
    %17 = vector.load %arg3[%c0_4, %c0_5] : memref<216x128xf32, #tpu.memory_space<vmem>>, vector<216x128xf32>
    %cst = arith.constant dense<0.000000e+00> : vector<256x128xf32>
    %18 = tpu.matmul %16, %17, %cst {dimension_numbers = #tpu.dot_dimension_numbers<[1], [0], [0], [1], [0, 0, 1, 1], [], []>} : vector<256x216xf32>, vector<216x128xf32>, vector<256x128xf32> -> vector<256x128xf32>
    %c0_6 = arith.constant 0 : index
    %c0_7 = arith.constant 0 : index
    %19 = vector.load %arg4[%c0_6, %c0_7] : memref<1x128xf32, #tpu.memory_space<vmem>>, vector<1x128xf32>
    %20 = vector.broadcast %19 : vector<1x128xf32> to vector<256x128xf32>
    %21 = arith.addf %18, %20 : vector<256x128xf32>
    %22 = vector.shape_cast %21 : vector<256x128xf32> to vector<4x8x8x128xf32>
    %c0_8 = arith.constant 0 : index
    %c0_9 = arith.constant 0 : index
    %c0_10 = arith.constant 0 : index
    %c0_11 = arith.constant 0 : index
    %c0_12 = arith.constant 0 : index
    %23 = vector.load %arg5[%c0_8, %c0_9, %c0_10, %c0_11, %c0_12] : memref<1x4x8x8x128xf32, #tpu.memory_space<vmem>>, vector<1x4x8x8x128xf32>
    %24 = vector.shape_cast %23 : vector<1x4x8x8x128xf32> to vector<4x8x8x128xf32>
    %25 = vector.shape_cast %22 : vector<4x8x8x128xf32> to vector<1x4x8x8x128xf32>
    tpu.vector_store %arg5[%c0_8, %c0_9, %c0_10, %c0_11, %c0_12], %25 {strides = array<i32>} : memref<1x4x8x8x128xf32, #tpu.memory_space<vmem>>, vector<1x4x8x8x128xf32>,
    return
  }
  func.func @transform_0(%arg0: i32, %arg1: i32) -> (i32, i32, i32, i32, i32) {
    %c2_i32 = arith.constant 2 : i32
    %0 = arith.muli %arg0, %c2_i32 : i32
    %1 = arith.addi %0, %arg1 : i32
    %c0_i32 = arith.constant 0 : i32
    %c0_i32_0 = arith.constant 0 : i32
    %c0_i32_1 = arith.constant 0 : i32
    %c0_i32_2 = arith.constant 0 : i32
    %c0_i32_3 = arith.constant 0 : i32
    return %1, %c0_i32, %c0_i32_0, %c0_i32_1, %c0_i32_2 : i32, i32, i32, i32, i32
  }
  func.func @transform_1(%arg0: i32, %arg1: i32) -> (i32, i32) {
    %c0_i32 = arith.constant 0 : i32
    %c0_i32_0 = arith.constant 0 : i32
    %c0_i32_1 = arith.constant 0 : i32
    return %c0_i32, %c0_i32_0 : i32, i32
  }
  func.func @transform_2(%arg0: i32, %arg1: i32) -> (i32, i32) {
    %c0_i32 = arith.constant 0 : i32
    %c0_i32_0 = arith.constant 0 : i32
    %c0_i32_1 = arith.constant 0 : i32
    return %c0_i32, %c0_i32_0 : i32, i32
  }
  func.func @transform_3(%arg0: i32, %arg1: i32) -> (i32, i32, i32, i32, i32) {
    %c2_i32 = arith.constant 2 : i32
    %0 = arith.muli %arg0, %c2_i32 : i32
    %1 = arith.addi %0, %arg1 : i32
    %c0_i32 = arith.constant 0 : i32
    %c0_i32_0 = arith.constant 0 : i32
    %c0_i32_1 = arith.constant 0 : i32
    %c0_i32_2 = arith.constant 0 : i32
    %c0_i32_3 = arith.constant 0 : i32
    return %1, %c0_i32, %c0_i32_0, %c0_i32_1, %c0_i32_2 : i32, i32, i32, i32, i32
  }
}

</mosaic_0001>

<llo_original>
// kernel: cnn_layer3d_plain.1
$region0: #{cnn_layer3d_plain.1}
  #allocation0 [shape = 'u32[]', space=smem, size = 0x4, offset = 0x4, fixed_abs, tag = 'smem constant byte address 0x4 - core index']
  #allocation1 [shape = 'u32[144,128]{1,0:T(1,128)}', space=vmem, size = 0x12000, scoped, tag = 'internal scratch']
  %s0 = inlined_call_operand.vmem [shape: f32[4,6,10,10,8], index: 0, kind: input, shape index: {}]
  %s1 = inlined_call_operand.vmem [shape: f32[216,128], index: 1, kind: input, shape index: {}]
  %s2 = inlined_call_operand.vmem [shape: f32[1,128], index: 2, kind: input, shape index: {}]
  %s3 = inlined_call_operand.vmem [shape: f32[4,4,8,8,128], index: 3, kind: output, shape index: {}]
  %s4 = sld [smem:[#allocation0]]
  $region45: #{cnn_layer3d_plain.1} parent=0
    _
  %s6 = ssub.s32 1, %s4
  %s7 = scalar_select 0, %s6, %s4
  loop: start=0, step=1, limit=6
  $region2: #{cnn_layer3d_plain.1} parent=0 // loop_pre_header
    _
  $region3: #{cnn_layer3d_plain.1} parent=0 // loop_header
    %s9 = sphi 0, %s13
    %p10 = scmp.ge.s32.totalorder %s9, 6
    %s16 = sphi 0, %s28
    %s17 = sphi 0, %s24
    %s18 = sphi 0, %s16
    %s19 = sphi 0, %s17
    %s20 = sphi 0, %s18
    %s21 = sphi 0, %s19
    %s35 = sphi 0, %s37
    %s38 = sphi 0, %s35
    %s39 = sphi 0, %s38
    %s55 = sphi 0, %s39
    %s59 = sphi 0, %s59
    %s61 = sphi 0, %s59
    %s62 = sphi 0, %s61
    %s76 = sphi 0, %s62
    %s80 = sphi 0, %s80
    %s82 = sphi 0, %s80
    %s83 = sphi 0, %s82
    %s97 = sphi 0, %s83
    %s107 = sphi 0, %s109
    %s110 = sphi 0, %s107
    %s111 = sphi 0, %s110
    %s127 = sphi 0, %s111
  $region4: #{cnn_layer3d_plain.1} parent=0 // loop_header_branch
    %12 = sbr.rel (%p10) target = $region8
  $region5: #{cnn_layer3d_plain.1} parent=0 // loop_body
    %s14 = ssub.s32 %s9, 1
    %s15 = ssub.s32 %s9, 2
    %s22 = sadd.s32 1, %s17
    %p23 = scmp.ge.s32.totalorder %s22, 2
    %s24 = scalar_select %p23, 0, %s22
    %s25 = sadd.s32 1, %s16
    %s26 = scalar_select %p23, %s25, %s16
    %p27 = scmp.ge.s32.totalorder %s26, 2
    %s28 = scalar_select %p27, 0, %s26
    %s29 = smul.u32 %s16, 2
    %s30 = sadd.s32 %s29, %s17
    %s31 = smul.u32 %s28, 2
    %s32 = sadd.s32 %s31, %s24
    %s33 = ssub.s32 %s30, %s32
    %p34 = scmp.eq.s32.totalorder %s33, 0
    %s36 = sadd.s32 %s35, 1
    %s37 = scalar_select %p34, %s35, %s36
    %p40 = pneg %p34
    %p41 = scmp.eq.s32.totalorder %s9, 3
    %p42 = por %p40, %p41
    %p43 = scmp.ne.s32.totalorder %s35, %s38
    %p44 = scmp.eq.s32.totalorder %s9, 0
    %p45 = por %p43, %p44
    %p46 = scmp.ne.s32.totalorder %s35, %s38
    %p47 = scmp.eq.s32.totalorder %s14, 3
    %p48 = por %p46, %p47
    %p49 = scmp.ne.s32.totalorder %s38, %s39
    %p50 = scmp.eq.s32.totalorder %s14, 0
    %p51 = por %p49, %p50
    %p52 = scmp.ne.s32.totalorder %s38, %s39
    %p53 = scmp.eq.s32.totalorder %s15, 3
    %p54 = por %p52, %p53
    %p56 = scmp.ne.s32.totalorder %s39, %s55
    %p57 = scmp.eq.s32.totalorder %s15, 0
    %p58 = por %p56, %p57
    %s60 = sadd.s32 %s59, 1
    %p63 = scmp.eq.s32.totalorder %s9, 3
    %p64 = scmp.ne.s32.totalorder %s59, %s61
    %p65 = scmp.eq.s32.totalorder %s9, 0
    %p66 = por %p64, %p65
    %p67 = scmp.ne.s32.totalorder %s59, %s61
    %p68 = scmp.eq.s32.totalorder %s14, 3
    %p69 = por %p67, %p68
    %p70 = scmp.ne.s32.totalorder %s61, %s62
    %p71 = scmp.eq.s32.totalorder %s14, 0
    %p72 = por %p70, %p71
    %p73 = scmp.ne.s32.totalorder %s61, %s62
    %p74 = scmp.eq.s32.totalorder %s15, 3
    %p75 = por %p73, %p74
    %p77 = scmp.ne.s32.totalorder %s62, %s76
    %p78 = scmp.eq.s32.totalorder %s15, 0
    %p79 = por %p77, %p78
    %s81 = sadd.s32 %s80, 1
    %p84 = scmp.eq.s32.totalorder %s9, 3
    %p85 = scmp.ne.s32.totalorder %s80, %s82
    %p86 = scmp.eq.s32.totalorder %s9, 0
    %p87 = por %p85, %p86
    %p88 = scmp.ne.s32.totalorder %s80, %s82
    %p89 = scmp.eq.s32.totalorder %s14, 3
    %p90 = por %p88, %p89
    %p91 = scmp.ne.s32.totalorder %s82, %s83
    %p92 = scmp.eq.s32.totalorder %s14, 0
    %p93 = por %p91, %p92
    %p94 = scmp.ne.s32.totalorder %s82, %s83
    %p95 = scmp.eq.s32.totalorder %s15, 3
    %p96 = por %p94, %p95
    %p98 = scmp.ne.s32.totalorder %s83, %s97
    %p99 = scmp.eq.s32.totalorder %s15, 0
    %p100 = por %p98, %p99
    %s101 = smul.u32 %s16, 2
    %s102 = sadd.s32 %s101, %s17
    %s103 = smul.u32 %s28, 2
    %s104 = sadd.s32 %s103, %s24
    %s105 = ssub.s32 %s102, %s104
    %p106 = scmp.eq.s32.totalorder %s105, 0
    %s108 = sadd.s32 %s107, 1
    %s109 = scalar_select %p106, %s107, %s108
    %p112 = pneg %p106
    %p113 = scmp.eq.s32.totalorder %s9, 3
    %p114 = por %p112, %p113
    %p115 = scmp.ne.s32.totalorder %s107, %s110
    %p116 = scmp.eq.s32.totalorder %s9, 0
    %p117 = por %p115, %p116
    %p118 = scmp.ne.s32.totalorder %s107, %s110
    %p119 = scmp.eq.s32.totalorder %s14, 3
    %p120 = por %p118, %p119
    %p121 = scmp.ne.s32.totalorder %s110, %s111
    %p122 = scmp.eq.s32.totalorder %s14, 0
    %p123 = por %p121, %p122
    %p124 = scmp.ne.s32.totalorder %s110, %s111
    %p125 = scmp.eq.s32.totalorder %s15, 3
    %p126 = por %p124, %p125
    %p128 = scmp.ne.s32.totalorder %s111, %s127
    %p129 = scmp.eq.s32.totalorder %s15, 0
    %p130 = por %p128, %p129
    %p131 = scmp.le.s32.totalorder 1, %s9
    %p132 = scmp.lt.s32.totalorder %s9, 5
    %p133 = pnand %p131, %p132
    %p134 = pneg %p133
    // Predicated region
    $region9: #{cnn_layer3d_plain.1} parent=5 // pred_check
      _
    $region10: #{cnn_layer3d_plain.1} parent=5 // pred_check_branch
      %136 = sbr.rel (%p133) target = $region12
    $region11: #{cnn_layer3d_plain.1} parent=5 // pred_region
      %s137 = ssub.s32 %s9, 1
      // Predicated region
      $region13: #{cnn_layer3d_plain.1} parent=11 // pred_check
        %p138 = pneg %p72
      $region14: #{cnn_layer3d_plain.1} parent=11 // pred_check_branch
        %140 = sbr.rel (%p138) target = $region16
      $region15: #{cnn_layer3d_plain.1} parent=11 // pred_region
        _
      $region16: #{cnn_layer3d_plain.1} parent=11 // pred_fallthru
        _
      // Predicated region
      $region17: #{cnn_layer3d_plain.1} parent=11 // pred_check
        %p141 = pneg %p93
      $region18: #{cnn_layer3d_plain.1} parent=11 // pred_check_branch
        %143 = sbr.rel (%p141) target = $region20
      $region19: #{cnn_layer3d_plain.1} parent=11 // pred_region
        _
      $region20: #{cnn_layer3d_plain.1} parent=11 // pred_fallthru
        _
    $region12: #{cnn_layer3d_plain.1} parent=5 // pred_fallthru
      _
    %p144 = scmp.lt.s32.totalorder %s9, 4
    // Predicated region
    $region21: #{cnn_layer3d_plain.1} parent=5 // pred_check
      %p145 = pneg %p144
    $region22: #{cnn_layer3d_plain.1} parent=5 // pred_check_branch
      %147 = sbr.rel (%p145) target = $region24
    $region23: #{cnn_layer3d_plain.1} parent=5 // pred_region
      // Predicated region
      $region25: #{cnn_layer3d_plain.1} parent=23 // pred_check
        %p148 = pneg %p45
      $region26: #{cnn_layer3d_plain.1} parent=23 // pred_check_branch
        %150 = sbr.rel (%p148) target = $region28
      $region27: #{cnn_layer3d_plain.1} parent=23 // pred_region
        %s151 = smul.u32 %s16, 2
        %s152 = sadd.s32 %s151, %s17
        %p153 = scmp.lt.s32.totalorder %s152, 3
        %s154 = scalar_select %p153, %s152, 3
        %s155 = smul.addr %s154, 120
        %s156 = smul.addr %s155, 8
        %s157 = scalar_lea.vmem %s0, %s156
        %s158 = smul.u32 %s16, 2
        %s159 = sadd.s32 %s158, %s17
      $region28: #{cnn_layer3d_plain.1} parent=23 // pred_fallthru
        _
    $region24: #{cnn_layer3d_plain.1} parent=5 // pred_fallthru
      _
    %p160 = scmp.le.s32.totalorder 1, %s9
    %p161 = scmp.lt.s32.totalorder %s9, 5
    %p162 = pnand %p160, %p161
    %p163 = pneg %p162
    // Predicated region
    $region29: #{cnn_layer3d_plain.1} parent=5 // pred_check
      _
    $region30: #{cnn_layer3d_plain.1} parent=5 // pred_check_branch
      %165 = sbr.rel (%p162) target = $region32
    $region31: #{cnn_layer3d_plain.1} parent=5 // pred_region
      %s166 = ssub.s32 %s9, 1
      %s167 = smul.u32 %s18, 2
      %s168 = sadd.s32 %s167, %s19
      %p169 = scmp.lt.s32.totalorder %s168, 3
      %s170 = scalar_select %p169, %s168, 3
      %s171 = smul.addr %s170, 120
      %s172 = smul.addr %s171, 8
      %s173 = scalar_lea.vmem %s0, %s172
      %p174 = pneg %p51
      %p175 = pneg %p48
      %p176 = pneg %p72
      %p177 = pneg %p69
      %p178 = pneg %p93
      %p179 = pneg %p90
      %p180 = pneg %p123
      %p181 = pneg %p120
      %s182 = smul.u32 %s18, 2
      %s183 = sadd.s32 %s182, %s19
      %p184 = scmp.lt.s32.totalorder %s183, 3
      %s185 = scalar_select %p184, %s183, 3
      %s186 = smul.addr %s185, 32
      %s187 = smul.addr %s186, 8
      %s188 = scalar_lea.vmem %s3, %s187
      %s189 = smul.u32 %s18, 2
      %s190 = sadd.s32 %s189, %s19
      %p191 = scmp.lt.s32.totalorder %s190, 3
      %s192 = scalar_select %p191, %s190, 3
      %s193 = smul.addr %s192, 120
      %s194 = smul.addr %s193, 8
      %s195 = scalar_lea.vmem %s0, %s194
      %s196 = smul.u32 %s18, 2
      %s197 = sadd.s32 %s196, %s19
      %s198 = smul.u32 %s18, 2
      %s199 = sadd.s32 %s198, %s19
      %p200 = scmp.lt.s32.totalorder %s199, 3
      %s201 = scalar_select %p200, %s199, 3
      %s202 = smul.addr %s201, 32
      %s203 = smul.addr %s202, 8
      %s204 = scalar_lea.vmem %s3, %s203
      %s205 = smul.u32 %s18, 2
      %s206 = sadd.s32 %s205, %s19
      %v207 = vld [vmem:[%s195] sm:$0xff]
      %v208 = vld [vmem:[%s195 + $0x8] sm:$0x3]
      %v209 = vld [vmem:[%s195 + $0x10] sm:$0xff]
      %v210 = vld [vmem:[%s195 + $0x18] sm:$0x3]
      %v211 = vld [vmem:[%s195 + $0x20] sm:$0xff]
      %v212 = vld [vmem:[%s195 + $0x28] sm:$0x3]
      %v213 = vld [vmem:[%s195 + $0x30] sm:$0xff]
      %v214 = vld [vmem:[%s195 + $0x38] sm:$0x3]
      %v215 = vld [vmem:[%s195 + $0x40] sm:$0xff]
      %v216 = vld [vmem:[%s195 + $0x48] sm:$0x3]
      %v217 = vld [vmem:[%s195 + $0x50] sm:$0xff]
      %v218 = vld [vmem:[%s195 + $0x58] sm:$0x3]
      %v219 = vld [vmem:[%s195 + $0x60] sm:$0xff]
      %v220 = vld [vmem:[%s195 + $0x68] sm:$0x3]
      %v221 = vld [vmem:[%s195 + $0x70] sm:$0xff]
      %v222 = vld [vmem:[%s195 + $0x78] sm:$0x3]
      %v223 = vld [vmem:[%s195 + $0x80] sm:$0xff]
      %v224 = vld [vmem:[%s195 + $0x88] sm:$0x3]
      %v225 = vld [vmem:[%s195 + $0x90] sm:$0xff]
      %v226 = vld [vmem:[%s195 + $0x98] sm:$0x3]
      %v227 = vld [vmem:[%s195 + $0xa0] sm:$0xff]
      %v228 = vld [vmem:[%s195 + $0xa8] sm:$0x3]
      %v229 = vld [vmem:[%s195 + $0xb0] sm:$0xff]
      %v230 = vld [vmem:[%s195 + $0xb8] sm:$0x3]
      %v231 = vld [vmem:[%s195 + $0xc0] sm:$0xff]
      %v232 = vld [vmem:[%s195 + $0xc8] sm:$0x3]
      %v233 = vld [vmem:[%s195 + $0xd0] sm:$0xff]
      %v234 = vld [vmem:[%s195 + $0xd8] sm:$0x3]
      %v235 = vld [vmem:[%s195 + $0xe0] sm:$0xff]
      %v236 = vld [vmem:[%s195 + $0xe8] sm:$0x3]
      %v237 = vld [vmem:[%s195 + $0xf0] sm:$0xff]
      %v238 = vld [vmem:[%s195 + $0xf8] sm:$0x3]
      %v239 = vld [vmem:[%s195 + $0x100] sm:$0xff]
      %v240 = vld [vmem:[%s195 + $0x108] sm:$0x3]
      %v241 = vld [vmem:[%s195 + $0x110] sm:$0xff]
      %v242 = vld [vmem:[%s195 + $0x118] sm:$0x3]
      %v243 = vld [vmem:[%s195 + $0x120] sm:$0xff]
      %v244 = vld [vmem:[%s195 + $0x128] sm:$0x3]
      %v245 = vld [vmem:[%s195 + $0x130] sm:$0xff]
      %v246 = vld [vmem:[%s195 + $0x138] sm:$0x3]
      %v247 = vld [vmem:[%s195 + $0x140] sm:$0xff]
      %v248 = vld [vmem:[%s195 + $0x148] sm:$0x3]
      %v249 = vld [vmem:[%s195 + $0x150] sm:$0xff]
      %v250 = vld [vmem:[%s195 + $0x158] sm:$0x3]
      %v251 = vld [vmem:[%s195 + $0x160] sm:$0xff]
      %v252 = vld [vmem:[%s195 + $0x168] sm:$0x3]
      %v253 = vld [vmem:[%s195 + $0x170] sm:$0xff]
      %v254 = vld [vmem:[%s195 + $0x178] sm:$0x3]
      %v255 = vld [vmem:[%s195 + $0x180] sm:$0xff]
      %v256 = vld [vmem:[%s195 + $0x188] sm:$0x3]
      %v257 = vld [vmem:[%s195 + $0x190] sm:$0xff]
      %v258 = vld [vmem:[%s195 + $0x198] sm:$0x3]
      %v259 = vld [vmem:[%s195 + $0x1a0] sm:$0xff]
      %v260 = vld [vmem:[%s195 + $0x1a8] sm:$0x3]
      %v261 = vld [vmem:[%s195 + $0x1b0] sm:$0xff]
      %v262 = vld [vmem:[%s195 + $0x1b8] sm:$0x3]
      %v263 = vld [vmem:[%s195 + $0x1c0] sm:$0xff]
      %v264 = vld [vmem:[%s195 + $0x1c8] sm:$0x3]
      %v265 = vld [vmem:[%s195 + $0x1d0] sm:$0xff]
      %v266 = vld [vmem:[%s195 + $0x1d8] sm:$0x3]
      %v267 = vld [vmem:[%s195 + $0x1e0] sm:$0xff]
      %v268 = vld [vmem:[%s195 + $0x1e8] sm:$0x3]
      %v269 = vld [vmem:[%s195 + $0x1f0] sm:$0xff]
      %v270 = vld [vmem:[%s195 + $0x1f8] sm:$0x3]
      %v271 = vld [vmem:[%s195 + $0x200] sm:$0xff]
      %v272 = vld [vmem:[%s195 + $0x208] sm:$0x3]
      %v273 = vld [vmem:[%s195 + $0x210] sm:$0xff]
      %v274 = vld [vmem:[%s195 + $0x218] sm:$0x3]
      %v275 = vld [vmem:[%s195 + $0x220] sm:$0xff]
      %v276 = vld [vmem:[%s195 + $0x228] sm:$0x3]
      %v277 = vld [vmem:[%s195 + $0x230] sm:$0xff]
      %v278 = vld [vmem:[%s195 + $0x238] sm:$0x3]
      %v279 = vld [vmem:[%s195 + $0x240] sm:$0xff]
      %v280 = vld [vmem:[%s195 + $0x248] sm:$0x3]
      %v281 = vld [vmem:[%s195 + $0x250] sm:$0xff]
      %v282 = vld [vmem:[%s195 + $0x258] sm:$0x3]
      %v283 = vld [vmem:[%s195 + $0x260] sm:$0xff]
      %v284 = vld [vmem:[%s195 + $0x268] sm:$0x3]
      %v285 = vld [vmem:[%s195 + $0x270] sm:$0xff]
      %v286 = vld [vmem:[%s195 + $0x278] sm:$0x3]
      %v287 = vld [vmem:[%s195 + $0x280] sm:$0xff]
      %v288 = vld [vmem:[%s195 + $0x288] sm:$0x3]
      %v289 = vld [vmem:[%s195 + $0x290] sm:$0xff]
      %v290 = vld [vmem:[%s195 + $0x298] sm:$0x3]
      %v291 = vld [vmem:[%s195 + $0x2a0] sm:$0xff]
      %v292 = vld [vmem:[%s195 + $0x2a8] sm:$0x3]
      %v293 = vld [vmem:[%s195 + $0x2b0] sm:$0xff]
      %v294 = vld [vmem:[%s195 + $0x2b8] sm:$0x3]
      %v295 = vld [vmem:[%s195 + $0x2c0] sm:$0xff]
      %v296 = vld [vmem:[%s195 + $0x2c8] sm:$0x3]
      %v297 = vld [vmem:[%s195 + $0x2d0] sm:$0xff]
      %v298 = vld [vmem:[%s195 + $0x2d8] sm:$0x3]
      %v299 = vld [vmem:[%s195 + $0x2e0] sm:$0xff]
      %v300 = vld [vmem:[%s195 + $0x2e8] sm:$0x3]
      %v301 = vld [vmem:[%s195 + $0x2f0] sm:$0xff]
      %v302 = vld [vmem:[%s195 + $0x2f8] sm:$0x3]
      %v303 = vld [vmem:[%s195 + $0x300] sm:$0xff]
      %v304 = vld [vmem:[%s195 + $0x308] sm:$0x3]
      %v305 = vld [vmem:[%s195 + $0x310] sm:$0xff]
      %v306 = vld [vmem:[%s195 + $0x318] sm:$0x3]
      %v307 = vld [vmem:[%s195 + $0x320] sm:$0xff]
      %v308 = vld [vmem:[%s195 + $0x328] sm:$0x3]
      %v309 = vld [vmem:[%s195 + $0x330] sm:$0xff]
      %v310 = vld [vmem:[%s195 + $0x338] sm:$0x3]
      %v311 = vld [vmem:[%s195 + $0x340] sm:$0xff]
      %v312 = vld [vmem:[%s195 + $0x348] sm:$0x3]
      %v313 = vld [vmem:[%s195 + $0x350] sm:$0xff]
      %v314 = vld [vmem:[%s195 + $0x358] sm:$0x3]
      %v315 = vld [vmem:[%s195 + $0x360] sm:$0xff]
      %v316 = vld [vmem:[%s195 + $0x368] sm:$0x3]
      %v317 = vld [vmem:[%s195 + $0x370] sm:$0xff]
      %v318 = vld [vmem:[%s195 + $0x378] sm:$0x3]
      %v319 = vld [vmem:[%s195 + $0x380] sm:$0xff]
      %v320 = vld [vmem:[%s195 + $0x388] sm:$0x3]
      %v321 = vld [vmem:[%s195 + $0x390] sm:$0xff]
      %v322 = vld [vmem:[%s195 + $0x398] sm:$0x3]
      %v323 = vld [vmem:[%s195 + $0x3a0] sm:$0xff]
      %v324 = vld [vmem:[%s195 + $0x3a8] sm:$0x3]
      %v325 = vld [vmem:[%s195 + $0x3b0] sm:$0xff]
      %v326 = vld [vmem:[%s195 + $0x3b8] sm:$0x3]
      %vm447 = vcmask 1046528
      %v448 = vrot.slane %v207, 1
      %v449 = vrot.slane %v208, 1
      %v450 = vsel %vm447, %v448, %v449
      %v451 = vrot.slane %v209, 1
      %v452 = vrot.slane %v210, 1
      %v453 = vsel %vm447, %v451, %v452
      %v454 = vrot.slane %v211, 1
      %v455 = vrot.slane %v212, 1
      %v456 = vsel %vm447, %v454, %v455
      %v457 = vrot.slane %v213, 1
      %v458 = vrot.slane %v214, 1
      %v459 = vsel %vm447, %v457, %v458
      %v460 = vrot.slane %v215, 1
      %v461 = vrot.slane %v216, 1
      %v462 = vsel %vm447, %v460, %v461
      %v463 = vrot.slane %v217, 1
      %v464 = vrot.slane %v218, 1
      %v465 = vsel %vm447, %v463, %v464
      %v466 = vrot.slane %v219, 1
      %v467 = vrot.slane %v220, 1
      %v468 = vsel %vm447, %v466, %v467
      %v469 = vrot.slane %v221, 1
      %v470 = vrot.slane %v222, 1
      %v471 = vsel %vm447, %v469, %v470
      %v472 = vrot.slane %v223, 1
      %v473 = vrot.slane %v224, 1
      %v474 = vsel %vm447, %v472, %v473
      %v475 = vrot.slane %v225, 1
      %v476 = vrot.slane %v226, 1
      %v477 = vsel %vm447, %v475, %v476
      %v478 = vrot.slane %v227, 1
      %v479 = vrot.slane %v228, 1
      %v480 = vsel %vm447, %v478, %v479
      %v481 = vrot.slane %v229, 1
      %v482 = vrot.slane %v230, 1
      %v483 = vsel %vm447, %v481, %v482
      %v484 = vrot.slane %v231, 1
      %v485 = vrot.slane %v232, 1
      %v486 = vsel %vm447, %v484, %v485
      %v487 = vrot.slane %v233, 1
      %v488 = vrot.slane %v234, 1
      %v489 = vsel %vm447, %v487, %v488
      %v490 = vrot.slane %v235, 1
      %v491 = vrot.slane %v236, 1
      %v492 = vsel %vm447, %v490, %v491
      %v493 = vrot.slane %v237, 1
      %v494 = vrot.slane %v238, 1
      %v495 = vsel %vm447, %v493, %v494
      %v496 = vrot.slane %v239, 1
      %v497 = vrot.slane %v240, 1
      %v498 = vsel %vm447, %v496, %v497
      %v499 = vrot.slane %v241, 1
      %v500 = vrot.slane %v242, 1
      %v501 = vsel %vm447, %v499, %v500
      %v502 = vrot.slane %v243, 1
      %v503 = vrot.slane %v244, 1
      %v504 = vsel %vm447, %v502, %v503
      %v505 = vrot.slane %v245, 1
      %v506 = vrot.slane %v246, 1
      %v507 = vsel %vm447, %v505, %v506
      %v508 = vrot.slane %v247, 1
      %v509 = vrot.slane %v248, 1
      %v510 = vsel %vm447, %v508, %v509
      %v511 = vrot.slane %v249, 1
      %v512 = vrot.slane %v250, 1
      %v513 = vsel %vm447, %v511, %v512
      %v514 = vrot.slane %v251, 1
      %v515 = vrot.slane %v252, 1
      %v516 = vsel %vm447, %v514, %v515
      %v517 = vrot.slane %v253, 1
      %v518 = vrot.slane %v254, 1
      %v519 = vsel %vm447, %v517, %v518
      %v520 = vrot.slane %v255, 1
      %v521 = vrot.slane %v256, 1
      %v522 = vsel %vm447, %v520, %v521
      %v523 = vrot.slane %v257, 1
      %v524 = vrot.slane %v258, 1
      %v525 = vsel %vm447, %v523, %v524
      %v526 = vrot.slane %v259, 1
      %v527 = vrot.slane %v260, 1
      %v528 = vsel %vm447, %v526, %v527
      %v529 = vrot.slane %v261, 1
      %v530 = vrot.slane %v262, 1
      %v531 = vsel %vm447, %v529, %v530
      %v532 = vrot.slane %v263, 1
      %v533 = vrot.slane %v264, 1
      %v534 = vsel %vm447, %v532, %v533
      %v535 = vrot.slane %v265, 1
      %v536 = vrot.slane %v266, 1
      %v537 = vsel %vm447, %v535, %v536
      %v538 = vrot.slane %v267, 1
      %v539 = vrot.slane %v268, 1
      %v540 = vsel %vm447, %v538, %v539
      %v541 = vrot.slane %v269, 1
      %v542 = vrot.slane %v270, 1
      %v543 = vsel %vm447, %v541, %v542
      %v544 = vrot.slane %v271, 1
      %v545 = vrot.slane %v272, 1
      %v546 = vsel %vm447, %v544, %v545
      %v547 = vrot.slane %v273, 1
      %v548 = vrot.slane %v274, 1
      %v549 = vsel %vm447, %v547, %v548
      %v550 = vrot.slane %v275, 1
      %v551 = vrot.slane %v276, 1
      %v552 = vsel %vm447, %v550, %v551
      %v553 = vrot.slane %v277, 1
      %v554 = vrot.slane %v278, 1
      %v555 = vsel %vm447, %v553, %v554
      %v556 = vrot.slane %v279, 1
      %v557 = vrot.slane %v280, 1
      %v558 = vsel %vm447, %v556, %v557
      %v559 = vrot.slane %v281, 1
      %v560 = vrot.slane %v282, 1
      %v561 = vsel %vm447, %v559, %v560
      %v562 = vrot.slane %v283, 1
      %v563 = vrot.slane %v284, 1
      %v564 = vsel %vm447, %v562, %v563
      %v565 = vrot.slane %v285, 1
      %v566 = vrot.slane %v286, 1
      %v567 = vsel %vm447, %v565, %v566
      %v568 = vrot.slane %v287, 1
      %v569 = vrot.slane %v288, 1
      %v570 = vsel %vm447, %v568, %v569
      %v571 = vrot.slane %v289, 1
      %v572 = vrot.slane %v290, 1
      %v573 = vsel %vm447, %v571, %v572
      %v574 = vrot.slane %v291, 1
      %v575 = vrot.slane %v292, 1
      %v576 = vsel %vm447, %v574, %v575
      %v577 = vrot.slane %v293, 1
      %v578 = vrot.slane %v294, 1
      %v579 = vsel %vm447, %v577, %v578
      %v580 = vrot.slane %v295, 1
      %v581 = vrot.slane %v296, 1
      %v582 = vsel %vm447, %v580, %v581
      %v583 = vrot.slane %v297, 1
      %v584 = vrot.slane %v298, 1
      %v585 = vsel %vm447, %v583, %v584
      %v586 = vrot.slane %v299, 1
      %v587 = vrot.slane %v300, 1
      %v588 = vsel %vm447, %v586, %v587
      %v589 = vrot.slane %v301, 1
      %v590 = vrot.slane %v302, 1
      %v591 = vsel %vm447, %v589, %v590
      %v592 = vrot.slane %v303, 1
      %v593 = vrot.slane %v304, 1
      %v594 = vsel %vm447, %v592, %v593
      %v595 = vrot.slane %v305, 1
      %v596 = vrot.slane %v306, 1
      %v597 = vsel %vm447, %v595, %v596
      %v598 = vrot.slane %v307, 1
      %v599 = vrot.slane %v308, 1
      %v600 = vsel %vm447, %v598, %v599
      %v601 = vrot.slane %v309, 1
      %v602 = vrot.slane %v310, 1
      %v603 = vsel %vm447, %v601, %v602
      %v604 = vrot.slane %v311, 1
      %v605 = vrot.slane %v312, 1
      %v606 = vsel %vm447, %v604, %v605
      %v607 = vrot.slane %v313, 1
      %v608 = vrot.slane %v314, 1
      %v609 = vsel %vm447, %v607, %v608
      %v610 = vrot.slane %v315, 1
      %v611 = vrot.slane %v316, 1
      %v612 = vsel %vm447, %v610, %v611
      %v613 = vrot.slane %v317, 1
      %v614 = vrot.slane %v318, 1
      %v615 = vsel %vm447, %v613, %v614
      %v616 = vrot.slane %v319, 1
      %v617 = vrot.slane %v320, 1
      %v618 = vsel %vm447, %v616, %v617
      %v619 = vrot.slane %v321, 1
      %v620 = vrot.slane %v322, 1
      %v621 = vsel %vm447, %v619, %v620
      %v622 = vrot.slane %v323, 1
      %v623 = vrot.slane %v324, 1
      %v624 = vsel %vm447, %v622, %v623
      %v625 = vrot.slane %v325, 1
      %v626 = vrot.slane %v326, 1
      %v627 = vsel %vm447, %v625, %v626
      %628 = vrot.lane.b32.xlu0 %v450, 8
      %v629 = vpop.permute.xlu0 %628
      %630 = vrot.lane.b32.xlu0 %v453, 8
      %v631 = vpop.permute.xlu0 %630
      %632 = vrot.lane.b32.xlu0 %v456, 8
      %v633 = vpop.permute.xlu0 %632
      %634 = vrot.lane.b32.xlu0 %v459, 8
      %v635 = vpop.permute.xlu0 %634
      %636 = vrot.lane.b32.xlu0 %v462, 8
      %v637 = vpop.permute.xlu0 %636
      %638 = vrot.lane.b32.xlu0 %v465, 8
      %v639 = vpop.permute.xlu0 %638
      %640 = vrot.lane.b32.xlu0 %v468, 8
      %v641 = vpop.permute.xlu0 %640
      %642 = vrot.lane.b32.xlu0 %v471, 8
      %v643 = vpop.permute.xlu0 %642
      %644 = vrot.lane.b32.xlu0 %v474, 8
      %v645 = vpop.permute.xlu0 %644
      %646 = vrot.lane.b32.xlu0 %v477, 8
      %v647 = vpop.permute.xlu0 %646
      %648 = vrot.lane.b32.xlu0 %v480, 8
      %v649 = vpop.permute.xlu0 %648
      %650 = vrot.lane.b32.xlu0 %v483, 8
      %v651 = vpop.permute.xlu0 %650
      %652 = vrot.lane.b32.xlu0 %v486, 8
      %v653 = vpop.permute.xlu0 %652
      %654 = vrot.lane.b32.xlu0 %v489, 8
      %v655 = vpop.permute.xlu0 %654
      %656 = vrot.lane.b32.xlu0 %v492, 8
      %v657 = vpop.permute.xlu0 %656
      %658 = vrot.lane.b32.xlu0 %v495, 8
      %v659 = vpop.permute.xlu0 %658
      %660 = vrot.lane.b32.xlu0 %v498, 8
      %v661 = vpop.permute.xlu0 %660
      %662 = vrot.lane.b32.xlu0 %v501, 8
      %v663 = vpop.permute.xlu0 %662
      %664 = vrot.lane.b32.xlu0 %v504, 8
      %v665 = vpop.permute.xlu0 %664
      %666 = vrot.lane.b32.xlu0 %v507, 8
      %v667 = vpop.permute.xlu0 %666
      %668 = vrot.lane.b32.xlu0 %v510, 8
      %v669 = vpop.permute.xlu0 %668
      %670 = vrot.lane.b32.xlu0 %v513, 8
      %v671 = vpop.permute.xlu0 %670
      %672 = vrot.lane.b32.xlu0 %v516, 8
      %v673 = vpop.permute.xlu0 %672
      %674 = vrot.lane.b32.xlu0 %v519, 8
      %v675 = vpop.permute.xlu0 %674
      %676 = vrot.lane.b32.xlu0 %v522, 8
      %v677 = vpop.permute.xlu0 %676
      %678 = vrot.lane.b32.xlu0 %v525, 8
      %v679 = vpop.permute.xlu0 %678
      %680 = vrot.lane.b32.xlu0 %v528, 8
      %v681 = vpop.permute.xlu0 %680
      %682 = vrot.lane.b32.xlu0 %v531, 8
      %v683 = vpop.permute.xlu0 %682
      %684 = vrot.lane.b32.xlu0 %v534, 8
      %v685 = vpop.permute.xlu0 %684
      %686 = vrot.lane.b32.xlu0 %v537, 8
      %v687 = vpop.permute.xlu0 %686
      %688 = vrot.lane.b32.xlu0 %v540, 8
      %v689 = vpop.permute.xlu0 %688
      %690 = vrot.lane.b32.xlu0 %v543, 8
      %v691 = vpop.permute.xlu0 %690
      %692 = vrot.lane.b32.xlu0 %v546, 8
      %v693 = vpop.permute.xlu0 %692
      %694 = vrot.lane.b32.xlu0 %v549, 8
      %v695 = vpop.permute.xlu0 %694
      %696 = vrot.lane.b32.xlu0 %v552, 8
      %v697 = vpop.permute.xlu0 %696
      %698 = vrot.lane.b32.xlu0 %v555, 8
      %v699 = vpop.permute.xlu0 %698
      %700 = vrot.lane.b32.xlu0 %v558, 8
      %v701 = vpop.permute.xlu0 %700
      %702 = vrot.lane.b32.xlu0 %v561, 8
      %v703 = vpop.permute.xlu0 %702
      %704 = vrot.lane.b32.xlu0 %v564, 8
      %v705 = vpop.permute.xlu0 %704
      %706 = vrot.lane.b32.xlu0 %v567, 8
      %v707 = vpop.permute.xlu0 %706
      %708 = vrot.lane.b32.xlu0 %v570, 8
      %v709 = vpop.permute.xlu0 %708
      %710 = vrot.lane.b32.xlu0 %v573, 8
      %v711 = vpop.permute.xlu0 %710
      %712 = vrot.lane.b32.xlu0 %v576, 8
      %v713 = vpop.permute.xlu0 %712
      %714 = vrot.lane.b32.xlu0 %v579, 8
      %v715 = vpop.permute.xlu0 %714
      %716 = vrot.lane.b32.xlu0 %v582, 8
      %v717 = vpop.permute.xlu0 %716
      %718 = vrot.lane.b32.xlu0 %v585, 8
      %v719 = vpop.permute.xlu0 %718
      %720 = vrot.lane.b32.xlu0 %v588, 8
      %v721 = vpop.permute.xlu0 %720
      %722 = vrot.lane.b32.xlu0 %v591, 8
      %v723 = vpop.permute.xlu0 %722
      %724 = vrot.lane.b32.xlu0 %v594, 8
      %v725 = vpop.permute.xlu0 %724
      %726 = vrot.lane.b32.xlu0 %v597, 8
      %v727 = vpop.permute.xlu0 %726
      %728 = vrot.lane.b32.xlu0 %v600, 8
      %v729 = vpop.permute.xlu0 %728
      %730 = vrot.lane.b32.xlu0 %v603, 8
      %v731 = vpop.permute.xlu0 %730
      %732 = vrot.lane.b32.xlu0 %v606, 8
      %v733 = vpop.permute.xlu0 %732
      %734 = vrot.lane.b32.xlu0 %v609, 8
      %v735 = vpop.permute.xlu0 %734
      %736 = vrot.lane.b32.xlu0 %v612, 8
      %v737 = vpop.permute.xlu0 %736
      %738 = vrot.lane.b32.xlu0 %v615, 8
      %v739 = vpop.permute.xlu0 %738
      %740 = vrot.lane.b32.xlu0 %v618, 8
      %v741 = vpop.permute.xlu0 %740
      %742 = vrot.lane.b32.xlu0 %v621, 8
      %v743 = vpop.permute.xlu0 %742
      %744 = vrot.lane.b32.xlu0 %v624, 8
      %v745 = vpop.permute.xlu0 %744
      %746 = vrot.lane.b32.xlu0 %v627, 8
      %v747 = vpop.permute.xlu0 %746
      %vm808 = vcmask 1045504
      %v809 = vrot.slane %v207, 2
      %v810 = vrot.slane %v208, 2
      %v811 = vsel %vm808, %v809, %v810
      %v812 = vrot.slane %v209, 2
      %v813 = vrot.slane %v210, 2
      %v814 = vsel %vm808, %v812, %v813
      %v815 = vrot.slane %v211, 2
      %v816 = vrot.slane %v212, 2
      %v817 = vsel %vm808, %v815, %v816
      %v818 = vrot.slane %v213, 2
      %v819 = vrot.slane %v214, 2
      %v820 = vsel %vm808, %v818, %v819
      %v821 = vrot.slane %v215, 2
      %v822 = vrot.slane %v216, 2
      %v823 = vsel %vm808, %v821, %v822
      %v824 = vrot.slane %v217, 2
      %v825 = vrot.slane %v218, 2
      %v826 = vsel %vm808, %v824, %v825
      %v827 = vrot.slane %v219, 2
      %v828 = vrot.slane %v220, 2
      %v829 = vsel %vm808, %v827, %v828
      %v830 = vrot.slane %v221, 2
      %v831 = vrot.slane %v222, 2
      %v832 = vsel %vm808, %v830, %v831
      %v833 = vrot.slane %v223, 2
      %v834 = vrot.slane %v224, 2
      %v835 = vsel %vm808, %v833, %v834
      %v836 = vrot.slane %v225, 2
      %v837 = vrot.slane %v226, 2
      %v838 = vsel %vm808, %v836, %v837
      %v839 = vrot.slane %v227, 2
      %v840 = vrot.slane %v228, 2
      %v841 = vsel %vm808, %v839, %v840
      %v842 = vrot.slane %v229, 2
      %v843 = vrot.slane %v230, 2
      %v844 = vsel %vm808, %v842, %v843
      %v845 = vrot.slane %v231, 2
      %v846 = vrot.slane %v232, 2
      %v847 = vsel %vm808, %v845, %v846
      %v848 = vrot.slane %v233, 2
      %v849 = vrot.slane %v234, 2
      %v850 = vsel %vm808, %v848, %v849
      %v851 = vrot.slane %v235, 2
      %v852 = vrot.slane %v236, 2
      %v853 = vsel %vm808, %v851, %v852
      %v854 = vrot.slane %v237, 2
      %v855 = vrot.slane %v238, 2
      %v856 = vsel %vm808, %v854, %v855
      %v857 = vrot.slane %v239, 2
      %v858 = vrot.slane %v240, 2
      %v859 = vsel %vm808, %v857, %v858
      %v860 = vrot.slane %v241, 2
      %v861 = vrot.slane %v242, 2
      %v862 = vsel %vm808, %v860, %v861
      %v863 = vrot.slane %v243, 2
      %v864 = vrot.slane %v244, 2
      %v865 = vsel %vm808, %v863, %v864
      %v866 = vrot.slane %v245, 2
      %v867 = vrot.slane %v246, 2
      %v868 = vsel %vm808, %v866, %v867
      %v869 = vrot.slane %v247, 2
      %v870 = vrot.slane %v248, 2
      %v871 = vsel %vm808, %v869, %v870
      %v872 = vrot.slane %v249, 2
      %v873 = vrot.slane %v250, 2
      %v874 = vsel %vm808, %v872, %v873
      %v875 = vrot.slane %v251, 2
      %v876 = vrot.slane %v252, 2
      %v877 = vsel %vm808, %v875, %v876
      %v878 = vrot.slane %v253, 2
      %v879 = vrot.slane %v254, 2
      %v880 = vsel %vm808, %v878, %v879
      %v881 = vrot.slane %v255, 2
      %v882 = vrot.slane %v256, 2
      %v883 = vsel %vm808, %v881, %v882
      %v884 = vrot.slane %v257, 2
      %v885 = vrot.slane %v258, 2
      %v886 = vsel %vm808, %v884, %v885
      %v887 = vrot.slane %v259, 2
      %v888 = vrot.slane %v260, 2
      %v889 = vsel %vm808, %v887, %v888
      %v890 = vrot.slane %v261, 2
      %v891 = vrot.slane %v262, 2
      %v892 = vsel %vm808, %v890, %v891
      %v893 = vrot.slane %v263, 2
      %v894 = vrot.slane %v264, 2
      %v895 = vsel %vm808, %v893, %v894
      %v896 = vrot.slane %v265, 2
      %v897 = vrot.slane %v266, 2
      %v898 = vsel %vm808, %v896, %v897
      %v899 = vrot.slane %v267, 2
      %v900 = vrot.slane %v268, 2
      %v901 = vsel %vm808, %v899, %v900
      %v902 = vrot.slane %v269, 2
      %v903 = vrot.slane %v270, 2
      %v904 = vsel %vm808, %v902, %v903
      %v905 = vrot.slane %v271, 2
      %v906 = vrot.slane %v272, 2
      %v907 = vsel %vm808, %v905, %v906
      %v908 = vrot.slane %v273, 2
      %v909 = vrot.slane %v274, 2
      %v910 = vsel %vm808, %v908, %v909
      %v911 = vrot.slane %v275, 2
      %v912 = vrot.slane %v276, 2
      %v913 = vsel %vm808, %v911, %v912
      %v914 = vrot.slane %v277, 2
      %v915 = vrot.slane %v278, 2
      %v916 = vsel %vm808, %v914, %v915
      %v917 = vrot.slane %v279, 2
      %v918 = vrot.slane %v280, 2
      %v919 = vsel %vm808, %v917, %v918
      %v920 = vrot.slane %v281, 2
      %v921 = vrot.slane %v282, 2
      %v922 = vsel %vm808, %v920, %v921
      %v923 = vrot.slane %v283, 2
      %v924 = vrot.slane %v284, 2
      %v925 = vsel %vm808, %v923, %v924
      %v926 = vrot.slane %v285, 2
      %v927 = vrot.slane %v286, 2
      %v928 = vsel %vm808, %v926, %v927
      %v929 = vrot.slane %v287, 2
      %v930 = vrot.slane %v288, 2
      %v931 = vsel %vm808, %v929, %v930
      %v932 = vrot.slane %v289, 2
      %v933 = vrot.slane %v290, 2
      %v934 = vsel %vm808, %v932, %v933
      %v935 = vrot.slane %v291, 2
      %v936 = vrot.slane %v292, 2
      %v937 = vsel %vm808, %v935, %v936
      %v938 = vrot.slane %v293, 2
      %v939 = vrot.slane %v294, 2
      %v940 = vsel %vm808, %v938, %v939
      %v941 = vrot.slane %v295, 2
      %v942 = vrot.slane %v296, 2
      %v943 = vsel %vm808, %v941, %v942
      %v944 = vrot.slane %v297, 2
      %v945 = vrot.slane %v298, 2
      %v946 = vsel %vm808, %v944, %v945
      %v947 = vrot.slane %v299, 2
      %v948 = vrot.slane %v300, 2
      %v949 = vsel %vm808, %v947, %v948
      %v950 = vrot.slane %v301, 2
      %v951 = vrot.slane %v302, 2
      %v952 = vsel %vm808, %v950, %v951
      %v953 = vrot.slane %v303, 2
      %v954 = vrot.slane %v304, 2
      %v955 = vsel %vm808, %v953, %v954
      %v956 = vrot.slane %v305, 2
      %v957 = vrot.slane %v306, 2
      %v958 = vsel %vm808, %v956, %v957
      %v959 = vrot.slane %v307, 2
      %v960 = vrot.slane %v308, 2
      %v961 = vsel %vm808, %v959, %v960
      %v962 = vrot.slane %v309, 2
      %v963 = vrot.slane %v310, 2
      %v964 = vsel %vm808, %v962, %v963
      %v965 = vrot.slane %v311, 2
      %v966 = vrot.slane %v312, 2
      %v967 = vsel %vm808, %v965, %v966
      %v968 = vrot.slane %v313, 2
      %v969 = vrot.slane %v314, 2
      %v970 = vsel %vm808, %v968, %v969
      %v971 = vrot.slane %v315, 2
      %v972 = vrot.slane %v316, 2
      %v973 = vsel %vm808, %v971, %v972
      %v974 = vrot.slane %v317, 2
      %v975 = vrot.slane %v318, 2
      %v976 = vsel %vm808, %v974, %v975
      %v977 = vrot.slane %v319, 2
      %v978 = vrot.slane %v320, 2
      %v979 = vsel %vm808, %v977, %v978
      %v980 = vrot.slane %v321, 2
      %v981 = vrot.slane %v322, 2
      %v982 = vsel %vm808, %v980, %v981
      %v983 = vrot.slane %v323, 2
      %v984 = vrot.slane %v324, 2
      %v985 = vsel %vm808, %v983, %v984
      %v986 = vrot.slane %v325, 2
      %v987 = vrot.slane %v326, 2
      %v988 = vsel %vm808, %v986, %v987
      %989 = vrot.lane.b32.xlu0 %v811, 16
      %v990 = vpop.permute.xlu0 %989
      %991 = vrot.lane.b32.xlu0 %v814, 16
      %v992 = vpop.permute.xlu0 %991
      %993 = vrot.lane.b32.xlu0 %v817, 16
      %v994 = vpop.permute.xlu0 %993
      %995 = vrot.lane.b32.xlu0 %v820, 16
      %v996 = vpop.permute.xlu0 %995
      %997 = vrot.lane.b32.xlu0 %v823, 16
      %v998 = vpop.permute.xlu0 %997
      %999 = vrot.lane.b32.xlu0 %v826, 16
      %v1000 = vpop.permute.xlu0 %999
      %1001 = vrot.lane.b32.xlu0 %v829, 16
      %v1002 = vpop.permute.xlu0 %1001
      %1003 = vrot.lane.b32.xlu0 %v832, 16
      %v1004 = vpop.permute.xlu0 %1003
      %1005 = vrot.lane.b32.xlu0 %v835, 16
      %v1006 = vpop.permute.xlu0 %1005
      %1007 = vrot.lane.b32.xlu0 %v838, 16
      %v1008 = vpop.permute.xlu0 %1007
      %1009 = vrot.lane.b32.xlu0 %v841, 16
      %v1010 = vpop.permute.xlu0 %1009
      %1011 = vrot.lane.b32.xlu0 %v844, 16
      %v1012 = vpop.permute.xlu0 %1011
      %1013 = vrot.lane.b32.xlu0 %v847, 16
      %v1014 = vpop.permute.xlu0 %1013
      %1015 = vrot.lane.b32.xlu0 %v850, 16
      %v1016 = vpop.permute.xlu0 %1015
      %1017 = vrot.lane.b32.xlu0 %v853, 16
      %v1018 = vpop.permute.xlu0 %1017
      %1019 = vrot.lane.b32.xlu0 %v856, 16
      %v1020 = vpop.permute.xlu0 %1019
      %1021 = vrot.lane.b32.xlu0 %v859, 16
      %v1022 = vpop.permute.xlu0 %1021
      %1023 = vrot.lane.b32.xlu0 %v862, 16
      %v1024 = vpop.permute.xlu0 %1023
      %1025 = vrot.lane.b32.xlu0 %v865, 16
      %v1026 = vpop.permute.xlu0 %1025
      %1027 = vrot.lane.b32.xlu0 %v868, 16
      %v1028 = vpop.permute.xlu0 %1027
      %1029 = vrot.lane.b32.xlu0 %v871, 16
      %v1030 = vpop.permute.xlu0 %1029
      %1031 = vrot.lane.b32.xlu0 %v874, 16
      %v1032 = vpop.permute.xlu0 %1031
      %1033 = vrot.lane.b32.xlu0 %v877, 16
      %v1034 = vpop.permute.xlu0 %1033
      %1035 = vrot.lane.b32.xlu0 %v880, 16
      %v1036 = vpop.permute.xlu0 %1035
      %1037 = vrot.lane.b32.xlu0 %v883, 16
      %v1038 = vpop.permute.xlu0 %1037
      %1039 = vrot.lane.b32.xlu0 %v886, 16
      %v1040 = vpop.permute.xlu0 %1039
      %1041 = vrot.lane.b32.xlu0 %v889, 16
      %v1042 = vpop.permute.xlu0 %1041
      %1043 = vrot.lane.b32.xlu0 %v892, 16
      %v1044 = vpop.permute.xlu0 %1043
      %1045 = vrot.lane.b32.xlu0 %v895, 16
      %v1046 = vpop.permute.xlu0 %1045
      %1047 = vrot.lane.b32.xlu0 %v898, 16
      %v1048 = vpop.permute.xlu0 %1047
      %1049 = vrot.lane.b32.xlu0 %v901, 16
      %v1050 = vpop.permute.xlu0 %1049
      %1051 = vrot.lane.b32.xlu0 %v904, 16
      %v1052 = vpop.permute.xlu0 %1051
      %1053 = vrot.lane.b32.xlu0 %v907, 16
      %v1054 = vpop.permute.xlu0 %1053
      %1055 = vrot.lane.b32.xlu0 %v910, 16
      %v1056 = vpop.permute.xlu0 %1055
      %1057 = vrot.lane.b32.xlu0 %v913, 16
      %v1058 = vpop.permute.xlu0 %1057
      %1059 = vrot.lane.b32.xlu0 %v916, 16
      %v1060 = vpop.permute.xlu0 %1059
      %1061 = vrot.lane.b32.xlu0 %v919, 16
      %v1062 = vpop.permute.xlu0 %1061
      %1063 = vrot.lane.b32.xlu0 %v922, 16
      %v1064 = vpop.permute.xlu0 %1063
      %1065 = vrot.lane.b32.xlu0 %v925, 16
      %v1066 = vpop.permute.xlu0 %1065
      %1067 = vrot.lane.b32.xlu0 %v928, 16
      %v1068 = vpop.permute.xlu0 %1067
      %1069 = vrot.lane.b32.xlu0 %v931, 16
      %v1070 = vpop.permute.xlu0 %1069
      %1071 = vrot.lane.b32.xlu0 %v934, 16
      %v1072 = vpop.permute.xlu0 %1071
      %1073 = vrot.lane.b32.xlu0 %v937, 16
      %v1074 = vpop.permute.xlu0 %1073
      %1075 = vrot.lane.b32.xlu0 %v940, 16
      %v1076 = vpop.permute.xlu0 %1075
      %1077 = vrot.lane.b32.xlu0 %v943, 16
      %v1078 = vpop.permute.xlu0 %1077
      %1079 = vrot.lane.b32.xlu0 %v946, 16
      %v1080 = vpop.permute.xlu0 %1079
      %1081 = vrot.lane.b32.xlu0 %v949, 16
      %v1082 = vpop.permute.xlu0 %1081
      %1083 = vrot.lane.b32.xlu0 %v952, 16
      %v1084 = vpop.permute.xlu0 %1083
      %1085 = vrot.lane.b32.xlu0 %v955, 16
      %v1086 = vpop.permute.xlu0 %1085
      %1087 = vrot.lane.b32.xlu0 %v958, 16
      %v1088 = vpop.permute.xlu0 %1087
      %1089 = vrot.lane.b32.xlu0 %v961, 16
      %v1090 = vpop.permute.xlu0 %1089
      %1091 = vrot.lane.b32.xlu0 %v964, 16
      %v1092 = vpop.permute.xlu0 %1091
      %1093 = vrot.lane.b32.xlu0 %v967, 16
      %v1094 = vpop.permute.xlu0 %1093
      %1095 = vrot.lane.b32.xlu0 %v970, 16
      %v1096 = vpop.permute.xlu0 %1095
      %1097 = vrot.lane.b32.xlu0 %v973, 16
      %v1098 = vpop.permute.xlu0 %1097
      %1099 = vrot.lane.b32.xlu0 %v976, 16
      %v1100 = vpop.permute.xlu0 %1099
      %1101 = vrot.lane.b32.xlu0 %v979, 16
      %v1102 = vpop.permute.xlu0 %1101
      %1103 = vrot.lane.b32.xlu0 %v982, 16
      %v1104 = vpop.permute.xlu0 %1103
      %1105 = vrot.lane.b32.xlu0 %v985, 16
      %v1106 = vpop.permute.xlu0 %1105
      %1107 = vrot.lane.b32.xlu0 %v988, 16
      %v1108 = vpop.permute.xlu0 %1107
      %vm1169 = vcmask 64512
      %v1170 = vsel %vm1169, %v207, %v629
      %v1171 = vsel %vm1169, %v209, %v631
      %v1172 = vsel %vm1169, %v211, %v633
      %v1173 = vsel %vm1169, %v213, %v635
      %v1174 = vsel %vm1169, %v215, %v637
      %v1175 = vsel %vm1169, %v217, %v639
      %v1176 = vsel %vm1169, %v219, %v641
      %v1177 = vsel %vm1169, %v221, %v643
      %v1178 = vsel %vm1169, %v223, %v645
      %v1179 = vsel %vm1169, %v225, %v647
      %v1180 = vsel %vm1169, %v227, %v649
      %v1181 = vsel %vm1169, %v229, %v651
      %v1182 = vsel %vm1169, %v231, %v653
      %v1183 = vsel %vm1169, %v233, %v655
      %v1184 = vsel %vm1169, %v235, %v657
      %v1185 = vsel %vm1169, %v237, %v659
      %v1186 = vsel %vm1169, %v239, %v661
      %v1187 = vsel %vm1169, %v241, %v663
      %v1188 = vsel %vm1169, %v243, %v665
      %v1189 = vsel %vm1169, %v245, %v667
      %v1190 = vsel %vm1169, %v247, %v669
      %v1191 = vsel %vm1169, %v249, %v671
      %v1192 = vsel %vm1169, %v251, %v673
      %v1193 = vsel %vm1169, %v253, %v675
      %v1194 = vsel %vm1169, %v255, %v677
      %v1195 = vsel %vm1169, %v257, %v679
      %v1196 = vsel %vm1169, %v259, %v681
      %v1197 = vsel %vm1169, %v261, %v683
      %v1198 = vsel %vm1169, %v263, %v685
      %v1199 = vsel %vm1169, %v265, %v687
      %v1200 = vsel %vm1169, %v267, %v689
      %v1201 = vsel %vm1169, %v269, %v691
      %v1202 = vsel %vm1169, %v271, %v693
      %v1203 = vsel %vm1169, %v273, %v695
      %v1204 = vsel %vm1169, %v275, %v697
      %v1205 = vsel %vm1169, %v277, %v699
      %v1206 = vsel %vm1169, %v279, %v701
      %v1207 = vsel %vm1169, %v281, %v703
      %v1208 = vsel %vm1169, %v283, %v705
      %v1209 = vsel %vm1169, %v285, %v707
      %v1210 = vsel %vm1169, %v287, %v709
      %v1211 = vsel %vm1169, %v289, %v711
      %v1212 = vsel %vm1169, %v291, %v713
      %v1213 = vsel %vm1169, %v293, %v715
      %v1214 = vsel %vm1169, %v295, %v717
      %v1215 = vsel %vm1169, %v297, %v719
      %v1216 = vsel %vm1169, %v299, %v721
      %v1217 = vsel %vm1169, %v301, %v723
      %v1218 = vsel %vm1169, %v303, %v725
      %v1219 = vsel %vm1169, %v305, %v727
      %v1220 = vsel %vm1169, %v307, %v729
      %v1221 = vsel %vm1169, %v309, %v731
      %v1222 = vsel %vm1169, %v311, %v733
      %v1223 = vsel %vm1169, %v313, %v735
      %v1224 = vsel %vm1169, %v315, %v737
      %v1225 = vsel %vm1169, %v317, %v739
      %v1226 = vsel %vm1169, %v319, %v741
      %v1227 = vsel %vm1169, %v321, %v743
      %v1228 = vsel %vm1169, %v323, %v745
      %v1229 = vsel %vm1169, %v325, %v747
      %vm1230 = vcmask 130048
      %v1231 = vsel %vm1230, %v1170, %v990
      %v1232 = vsel %vm1230, %v1171, %v992
      %v1233 = vsel %vm1230, %v1172, %v994
      %v1234 = vsel %vm1230, %v1173, %v996
      %v1235 = vsel %vm1230, %v1174, %v998
      %v1236 = vsel %vm1230, %v1175, %v1000
      %v1237 = vsel %vm1230, %v1176, %v1002
      %v1238 = vsel %vm1230, %v1177, %v1004
      %v1239 = vsel %vm1230, %v1178, %v1006
      %v1240 = vsel %vm1230, %v1179, %v1008
      %v1241 = vsel %vm1230, %v1180, %v1010
      %v1242 = vsel %vm1230, %v1181, %v1012
      %v1243 = vsel %vm1230, %v1182, %v1014
      %v1244 = vsel %vm1230, %v1183, %v1016
      %v1245 = vsel %vm1230, %v1184, %v1018
      %v1246 = vsel %vm1230, %v1185, %v1020
      %v1247 = vsel %vm1230, %v1186, %v1022
      %v1248 = vsel %vm1230, %v1187, %v1024
      %v1249 = vsel %vm1230, %v1188, %v1026
      %v1250 = vsel %vm1230, %v1189, %v1028
      %v1251 = vsel %vm1230, %v1190, %v1030
      %v1252 = vsel %vm1230, %v1191, %v1032
      %v1253 = vsel %vm1230, %v1192, %v1034
      %v1254 = vsel %vm1230, %v1193, %v1036
      %v1255 = vsel %vm1230, %v1194, %v1038
      %v1256 = vsel %vm1230, %v1195, %v1040
      %v1257 = vsel %vm1230, %v1196, %v1042
      %v1258 = vsel %vm1230, %v1197, %v1044
      %v1259 = vsel %vm1230, %v1198, %v1046
      %v1260 = vsel %vm1230, %v1199, %v1048
      %v1261 = vsel %vm1230, %v1200, %v1050
      %v1262 = vsel %vm1230, %v1201, %v1052
      %v1263 = vsel %vm1230, %v1202, %v1054
      %v1264 = vsel %vm1230, %v1203, %v1056
      %v1265 = vsel %vm1230, %v1204, %v1058
      %v1266 = vsel %vm1230, %v1205, %v1060
      %v1267 = vsel %vm1230, %v1206, %v1062
      %v1268 = vsel %vm1230, %v1207, %v1064
      %v1269 = vsel %vm1230, %v1208, %v1066
      %v1270 = vsel %vm1230, %v1209, %v1068
      %v1271 = vsel %vm1230, %v1210, %v1070
      %v1272 = vsel %vm1230, %v1211, %v1072
      %v1273 = vsel %vm1230, %v1212, %v1074
      %v1274 = vsel %vm1230, %v1213, %v1076
      %v1275 = vsel %vm1230, %v1214, %v1078
      %v1276 = vsel %vm1230, %v1215, %v1080
      %v1277 = vsel %vm1230, %v1216, %v1082
      %v1278 = vsel %vm1230, %v1217, %v1084
      %v1279 = vsel %vm1230, %v1218, %v1086
      %v1280 = vsel %vm1230, %v1219, %v1088
      %v1281 = vsel %vm1230, %v1220, %v1090
      %v1282 = vsel %vm1230, %v1221, %v1092
      %v1283 = vsel %vm1230, %v1222, %v1094
      %v1284 = vsel %vm1230, %v1223, %v1096
      %v1285 = vsel %vm1230, %v1224, %v1098
      %v1286 = vsel %vm1230, %v1225, %v1100
      %v1287 = vsel %vm1230, %v1226, %v1102
      %v1288 = vsel %vm1230, %v1227, %v1104
      %v1289 = vsel %vm1230, %v1228, %v1106
      %v1290 = vsel %vm1230, %v1229, %v1108
      %1323 = vrot.lane.b32.xlu0 %v1232, 24
      %v1324 = vpop.permute.xlu0 %1323
      %1325 = vrot.lane.b32.xlu0 %v1233, 24
      %v1326 = vpop.permute.xlu0 %1325
      %1327 = vrot.lane.b32.xlu0 %v1234, 24
      %v1328 = vpop.permute.xlu0 %1327
      %1329 = vrot.lane.b32.xlu0 %v1235, 24
      %v1330 = vpop.permute.xlu0 %1329
      %1331 = vrot.lane.b32.xlu0 %v1236, 24
      %v1332 = vpop.permute.xlu0 %1331
      %1333 = vrot.lane.b32.xlu0 %v1237, 24
      %v1334 = vpop.permute.xlu0 %1333
      %1335 = vrot.lane.b32.xlu0 %v1238, 24
      %v1336 = vpop.permute.xlu0 %1335
      %1337 = vrot.lane.b32.xlu0 %v1239, 24
      %v1338 = vpop.permute.xlu0 %1337
      %1339 = vrot.lane.b32.xlu0 %v1242, 24
      %v1340 = vpop.permute.xlu0 %1339
      %1341 = vrot.lane.b32.xlu0 %v1243, 24
      %v1342 = vpop.permute.xlu0 %1341
      %1343 = vrot.lane.b32.xlu0 %v1244, 24
      %v1344 = vpop.permute.xlu0 %1343
      %1345 = vrot.lane.b32.xlu0 %v1245, 24
      %v1346 = vpop.permute.xlu0 %1345
      %1347 = vrot.lane.b32.xlu0 %v1246, 24
      %v1348 = vpop.permute.xlu0 %1347
      %1349 = vrot.lane.b32.xlu0 %v1247, 24
      %v1350 = vpop.permute.xlu0 %1349
      %1351 = vrot.lane.b32.xlu0 %v1248, 24
      %v1352 = vpop.permute.xlu0 %1351
      %1353 = vrot.lane.b32.xlu0 %v1249, 24
      %v1354 = vpop.permute.xlu0 %1353
      %1355 = vrot.lane.b32.xlu0 %v1252, 24
      %v1356 = vpop.permute.xlu0 %1355
      %1357 = vrot.lane.b32.xlu0 %v1253, 24
      %v1358 = vpop.permute.xlu0 %1357
      %1359 = vrot.lane.b32.xlu0 %v1254, 24
      %v1360 = vpop.permute.xlu0 %1359
      %1361 = vrot.lane.b32.xlu0 %v1255, 24
      %v1362 = vpop.permute.xlu0 %1361
      %1363 = vrot.lane.b32.xlu0 %v1256, 24
      %v1364 = vpop.permute.xlu0 %1363
      %1365 = vrot.lane.b32.xlu0 %v1257, 24
      %v1366 = vpop.permute.xlu0 %1365
      %1367 = vrot.lane.b32.xlu0 %v1258, 24
      %v1368 = vpop.permute.xlu0 %1367
      %1369 = vrot.lane.b32.xlu0 %v1259, 24
      %v1370 = vpop.permute.xlu0 %1369
      %1371 = vrot.lane.b32.xlu0 %v1262, 24
      %v1372 = vpop.permute.xlu0 %1371
      %1373 = vrot.lane.b32.xlu0 %v1263, 24
      %v1374 = vpop.permute.xlu0 %1373
      %1375 = vrot.lane.b32.xlu0 %v1264, 24
      %v1376 = vpop.permute.xlu0 %1375
      %1377 = vrot.lane.b32.xlu0 %v1265, 24
      %v1378 = vpop.permute.xlu0 %1377
      %1379 = vrot.lane.b32.xlu0 %v1266, 24
      %v1380 = vpop.permute.xlu0 %1379
      %1381 = vrot.lane.b32.xlu0 %v1267, 24
      %v1382 = vpop.permute.xlu0 %1381
      %1383 = vrot.lane.b32.xlu0 %v1268, 24
      %v1384 = vpop.permute.xlu0 %1383
      %1385 = vrot.lane.b32.xlu0 %v1269, 24
      %v1386 = vpop.permute.xlu0 %1385
      %1423 = vrot.lane.b32.xlu0 %v1233, 48
      %v1424 = vpop.permute.xlu0 %1423
      %1425 = vrot.lane.b32.xlu0 %v1234, 48
      %v1426 = vpop.permute.xlu0 %1425
      %1427 = vrot.lane.b32.xlu0 %v1235, 48
      %v1428 = vpop.permute.xlu0 %1427
      %1429 = vrot.lane.b32.xlu0 %v1236, 48
      %v1430 = vpop.permute.xlu0 %1429
      %1431 = vrot.lane.b32.xlu0 %v1237, 48
      %v1432 = vpop.permute.xlu0 %1431
      %1433 = vrot.lane.b32.xlu0 %v1238, 48
      %v1434 = vpop.permute.xlu0 %1433
      %1435 = vrot.lane.b32.xlu0 %v1239, 48
      %v1436 = vpop.permute.xlu0 %1435
      %1437 = vrot.lane.b32.xlu0 %v1240, 48
      %v1438 = vpop.permute.xlu0 %1437
      %1439 = vrot.lane.b32.xlu0 %v1243, 48
      %v1440 = vpop.permute.xlu0 %1439
      %1441 = vrot.lane.b32.xlu0 %v1244, 48
      %v1442 = vpop.permute.xlu0 %1441
      %1443 = vrot.lane.b32.xlu0 %v1245, 48
      %v1444 = vpop.permute.xlu0 %1443
      %1445 = vrot.lane.b32.xlu0 %v1246, 48
      %v1446 = vpop.permute.xlu0 %1445
      %1447 = vrot.lane.b32.xlu0 %v1247, 48
      %v1448 = vpop.permute.xlu0 %1447
      %1449 = vrot.lane.b32.xlu0 %v1248, 48
      %v1450 = vpop.permute.xlu0 %1449
      %1451 = vrot.lane.b32.xlu0 %v1249, 48
      %v1452 = vpop.permute.xlu0 %1451
      %1453 = vrot.lane.b32.xlu0 %v1250, 48
      %v1454 = vpop.permute.xlu0 %1453
      %1455 = vrot.lane.b32.xlu0 %v1253, 48
      %v1456 = vpop.permute.xlu0 %1455
      %1457 = vrot.lane.b32.xlu0 %v1254, 48
      %v1458 = vpop.permute.xlu0 %1457
      %1459 = vrot.lane.b32.xlu0 %v1255, 48
      %v1460 = vpop.permute.xlu0 %1459
      %1461 = vrot.lane.b32.xlu0 %v1256, 48
      %v1462 = vpop.permute.xlu0 %1461
      %1463 = vrot.lane.b32.xlu0 %v1257, 48
      %v1464 = vpop.permute.xlu0 %1463
      %1465 = vrot.lane.b32.xlu0 %v1258, 48
      %v1466 = vpop.permute.xlu0 %1465
      %1467 = vrot.lane.b32.xlu0 %v1259, 48
      %v1468 = vpop.permute.xlu0 %1467
      %1469 = vrot.lane.b32.xlu0 %v1260, 48
      %v1470 = vpop.permute.xlu0 %1469
      %1471 = vrot.lane.b32.xlu0 %v1263, 48
      %v1472 = vpop.permute.xlu0 %1471
      %1473 = vrot.lane.b32.xlu0 %v1264, 48
      %v1474 = vpop.permute.xlu0 %1473
      %1475 = vrot.lane.b32.xlu0 %v1265, 48
      %v1476 = vpop.permute.xlu0 %1475
      %1477 = vrot.lane.b32.xlu0 %v1266, 48
      %v1478 = vpop.permute.xlu0 %1477
      %1479 = vrot.lane.b32.xlu0 %v1267, 48
      %v1480 = vpop.permute.xlu0 %1479
      %1481 = vrot.lane.b32.xlu0 %v1268, 48
      %v1482 = vpop.permute.xlu0 %1481
      %1483 = vrot.lane.b32.xlu0 %v1269, 48
      %v1484 = vpop.permute.xlu0 %1483
      %1485 = vrot.lane.b32.xlu0 %v1270, 48
      %v1486 = vpop.permute.xlu0 %1485
      %1530 = vrot.lane.b32.xlu0 %v1241, 72
      %v1531 = vpop.permute.xlu0 %1530
      %1532 = vrot.lane.b32.xlu0 %v1242, 72
      %v1533 = vpop.permute.xlu0 %1532
      %1534 = vrot.lane.b32.xlu0 %v1243, 72
      %v1535 = vpop.permute.xlu0 %1534
      %1536 = vrot.lane.b32.xlu0 %v1244, 72
      %v1537 = vpop.permute.xlu0 %1536
      %1538 = vrot.lane.b32.xlu0 %v1245, 72
      %v1539 = vpop.permute.xlu0 %1538
      %1540 = vrot.lane.b32.xlu0 %v1246, 72
      %v1541 = vpop.permute.xlu0 %1540
      %1542 = vrot.lane.b32.xlu0 %v1247, 72
      %v1543 = vpop.permute.xlu0 %1542
      %1544 = vrot.lane.b32.xlu0 %v1248, 72
      %v1545 = vpop.permute.xlu0 %1544
      %1546 = vrot.lane.b32.xlu0 %v1251, 72
      %v1547 = vpop.permute.xlu0 %1546
      %1548 = vrot.lane.b32.xlu0 %v1252, 72
      %v1549 = vpop.permute.xlu0 %1548
      %1550 = vrot.lane.b32.xlu0 %v1253, 72
      %v1551 = vpop.permute.xlu0 %1550
      %1552 = vrot.lane.b32.xlu0 %v1254, 72
      %v1553 = vpop.permute.xlu0 %1552
      %1554 = vrot.lane.b32.xlu0 %v1255, 72
      %v1555 = vpop.permute.xlu0 %1554
      %1556 = vrot.lane.b32.xlu0 %v1256, 72
      %v1557 = vpop.permute.xlu0 %1556
      %1558 = vrot.lane.b32.xlu0 %v1257, 72
      %v1559 = vpop.permute.xlu0 %1558
      %1560 = vrot.lane.b32.xlu0 %v1258, 72
      %v1561 = vpop.permute.xlu0 %1560
      %1562 = vrot.lane.b32.xlu0 %v1261, 72
      %v1563 = vpop.permute.xlu0 %1562
      %1564 = vrot.lane.b32.xlu0 %v1262, 72
      %v1565 = vpop.permute.xlu0 %1564
      %1566 = vrot.lane.b32.xlu0 %v1263, 72
      %v1567 = vpop.permute.xlu0 %1566
      %1568 = vrot.lane.b32.xlu0 %v1264, 72
      %v1569 = vpop.permute.xlu0 %1568
      %1570 = vrot.lane.b32.xlu0 %v1265, 72
      %v1571 = vpop.permute.xlu0 %1570
      %1572 = vrot.lane.b32.xlu0 %v1266, 72
      %v1573 = vpop.permute.xlu0 %1572
      %1574 = vrot.lane.b32.xlu0 %v1267, 72
      %v1575 = vpop.permute.xlu0 %1574
      %1576 = vrot.lane.b32.xlu0 %v1268, 72
      %v1577 = vpop.permute.xlu0 %1576
      %1578 = vrot.lane.b32.xlu0 %v1271, 72
      %v1579 = vpop.permute.xlu0 %1578
      %1580 = vrot.lane.b32.xlu0 %v1272, 72
      %v1581 = vpop.permute.xlu0 %1580
      %1582 = vrot.lane.b32.xlu0 %v1273, 72
      %v1583 = vpop.permute.xlu0 %1582
      %1584 = vrot.lane.b32.xlu0 %v1274, 72
      %v1585 = vpop.permute.xlu0 %1584
      %1586 = vrot.lane.b32.xlu0 %v1275, 72
      %v1587 = vpop.permute.xlu0 %1586
      %1588 = vrot.lane.b32.xlu0 %v1276, 72
      %v1589 = vpop.permute.xlu0 %1588
      %1590 = vrot.lane.b32.xlu0 %v1277, 72
      %v1591 = vpop.permute.xlu0 %1590
      %1592 = vrot.lane.b32.xlu0 %v1278, 72
      %v1593 = vpop.permute.xlu0 %1592
      %1627 = vrot.lane.b32.xlu0 %v1242, 96
      %v1628 = vpop.permute.xlu0 %1627
      %1629 = vrot.lane.b32.xlu0 %v1243, 96
      %v1630 = vpop.permute.xlu0 %1629
      %1631 = vrot.lane.b32.xlu0 %v1244, 96
      %v1632 = vpop.permute.xlu0 %1631
      %1633 = vrot.lane.b32.xlu0 %v1245, 96
      %v1634 = vpop.permute.xlu0 %1633
      %1635 = vrot.lane.b32.xlu0 %v1246, 96
      %v1636 = vpop.permute.xlu0 %1635
      %1637 = vrot.lane.b32.xlu0 %v1247, 96
      %v1638 = vpop.permute.xlu0 %1637
      %1639 = vrot.lane.b32.xlu0 %v1248, 96
      %v1640 = vpop.permute.xlu0 %1639
      %1641 = vrot.lane.b32.xlu0 %v1249, 96
      %v1642 = vpop.permute.xlu0 %1641
      %1643 = vrot.lane.b32.xlu0 %v1252, 96
      %v1644 = vpop.permute.xlu0 %1643
      %1645 = vrot.lane.b32.xlu0 %v1253, 96
      %v1646 = vpop.permute.xlu0 %1645
      %1647 = vrot.lane.b32.xlu0 %v1254, 96
      %v1648 = vpop.permute.xlu0 %1647
      %1649 = vrot.lane.b32.xlu0 %v1255, 96
      %v1650 = vpop.permute.xlu0 %1649
      %1651 = vrot.lane.b32.xlu0 %v1256, 96
      %v1652 = vpop.permute.xlu0 %1651
      %1653 = vrot.lane.b32.xlu0 %v1257, 96
      %v1654 = vpop.permute.xlu0 %1653
      %1655 = vrot.lane.b32.xlu0 %v1258, 96
      %v1656 = vpop.permute.xlu0 %1655
      %1657 = vrot.lane.b32.xlu0 %v1259, 96
      %v1658 = vpop.permute.xlu0 %1657
      %1659 = vrot.lane.b32.xlu0 %v1262, 96
      %v1660 = vpop.permute.xlu0 %1659
      %1661 = vrot.lane.b32.xlu0 %v1263, 96
      %v1662 = vpop.permute.xlu0 %1661
      %1663 = vrot.lane.b32.xlu0 %v1264, 96
      %v1664 = vpop.permute.xlu0 %1663
      %1665 = vrot.lane.b32.xlu0 %v1265, 96
      %v1666 = vpop.permute.xlu0 %1665
      %1667 = vrot.lane.b32.xlu0 %v1266, 96
      %v1668 = vpop.permute.xlu0 %1667
      %1669 = vrot.lane.b32.xlu0 %v1267, 96
      %v1670 = vpop.permute.xlu0 %1669
      %1671 = vrot.lane.b32.xlu0 %v1268, 96
      %v1672 = vpop.permute.xlu0 %1671
      %1673 = vrot.lane.b32.xlu0 %v1269, 96
      %v1674 = vpop.permute.xlu0 %1673
      %1675 = vrot.lane.b32.xlu0 %v1272, 96
      %v1676 = vpop.permute.xlu0 %1675
      %1677 = vrot.lane.b32.xlu0 %v1273, 96
      %v1678 = vpop.permute.xlu0 %1677
      %1679 = vrot.lane.b32.xlu0 %v1274, 96
      %v1680 = vpop.permute.xlu0 %1679
      %1681 = vrot.lane.b32.xlu0 %v1275, 96
      %v1682 = vpop.permute.xlu0 %1681
      %1683 = vrot.lane.b32.xlu0 %v1276, 96
      %v1684 = vpop.permute.xlu0 %1683
      %1685 = vrot.lane.b32.xlu0 %v1277, 96
      %v1686 = vpop.permute.xlu0 %1685
      %1687 = vrot.lane.b32.xlu0 %v1278, 96
      %v1688 = vpop.permute.xlu0 %1687
      %1689 = vrot.lane.b32.xlu0 %v1279, 96
      %v1690 = vpop.permute.xlu0 %1689
      %1724 = vrot.lane.b32.xlu0 %v1243, 120
      %v1725 = vpop.permute.xlu0 %1724
      %1726 = vrot.lane.b32.xlu0 %v1244, 120
      %v1727 = vpop.permute.xlu0 %1726
      %1728 = vrot.lane.b32.xlu0 %v1245, 120
      %v1729 = vpop.permute.xlu0 %1728
      %1730 = vrot.lane.b32.xlu0 %v1246, 120
      %v1731 = vpop.permute.xlu0 %1730
      %1732 = vrot.lane.b32.xlu0 %v1247, 120
      %v1733 = vpop.permute.xlu0 %1732
      %1734 = vrot.lane.b32.xlu0 %v1248, 120
      %v1735 = vpop.permute.xlu0 %1734
      %1736 = vrot.lane.b32.xlu0 %v1249, 120
      %v1737 = vpop.permute.xlu0 %1736
      %1738 = vrot.lane.b32.xlu0 %v1250, 120
      %v1739 = vpop.permute.xlu0 %1738
      %1740 = vrot.lane.b32.xlu0 %v1253, 120
      %v1741 = vpop.permute.xlu0 %1740
      %1742 = vrot.lane.b32.xlu0 %v1254, 120
      %v1743 = vpop.permute.xlu0 %1742
      %1744 = vrot.lane.b32.xlu0 %v1255, 120
      %v1745 = vpop.permute.xlu0 %1744
      %1746 = vrot.lane.b32.xlu0 %v1256, 120
      %v1747 = vpop.permute.xlu0 %1746
      %1748 = vrot.lane.b32.xlu0 %v1257, 120
      %v1749 = vpop.permute.xlu0 %1748
      %1750 = vrot.lane.b32.xlu0 %v1258, 120
      %v1751 = vpop.permute.xlu0 %1750
      %1752 = vrot.lane.b32.xlu0 %v1259, 120
      %v1753 = vpop.permute.xlu0 %1752
      %1754 = vrot.lane.b32.xlu0 %v1260, 120
      %v1755 = vpop.permute.xlu0 %1754
      %1756 = vrot.lane.b32.xlu0 %v1263, 120
      %v1757 = vpop.permute.xlu0 %1756
      %1758 = vrot.lane.b32.xlu0 %v1264, 120
      %v1759 = vpop.permute.xlu0 %1758
      %1760 = vrot.lane.b32.xlu0 %v1265, 120
      %v1761 = vpop.permute.xlu0 %1760
      %1762 = vrot.lane.b32.xlu0 %v1266, 120
      %v1763 = vpop.permute.xlu0 %1762
      %1764 = vrot.lane.b32.xlu0 %v1267, 120
      %v1765 = vpop.permute.xlu0 %1764
      %1766 = vrot.lane.b32.xlu0 %v1268, 120
      %v1767 = vpop.permute.xlu0 %1766
      %1768 = vrot.lane.b32.xlu0 %v1269, 120
      %v1769 = vpop.permute.xlu0 %1768
      %1770 = vrot.lane.b32.xlu0 %v1270, 120
      %v1771 = vpop.permute.xlu0 %1770
      %1772 = vrot.lane.b32.xlu0 %v1273, 120
      %v1773 = vpop.permute.xlu0 %1772
      %1774 = vrot.lane.b32.xlu0 %v1274, 120
      %v1775 = vpop.permute.xlu0 %1774
      %1776 = vrot.lane.b32.xlu0 %v1275, 120
      %v1777 = vpop.permute.xlu0 %1776
      %1778 = vrot.lane.b32.xlu0 %v1276, 120
      %v1779 = vpop.permute.xlu0 %1778
      %1780 = vrot.lane.b32.xlu0 %v1277, 120
      %v1781 = vpop.permute.xlu0 %1780
      %1782 = vrot.lane.b32.xlu0 %v1278, 120
      %v1783 = vpop.permute.xlu0 %1782
      %1784 = vrot.lane.b32.xlu0 %v1279, 120
      %v1785 = vpop.permute.xlu0 %1784
      %1786 = vrot.lane.b32.xlu0 %v1280, 120
      %v1787 = vpop.permute.xlu0 %1786
      %1828 = vrot.lane.b32.xlu0 %v1251, 16
      %v1829 = vpop.permute.xlu0 %1828
      %1830 = vrot.lane.b32.xlu0 %v1252, 16
      %v1831 = vpop.permute.xlu0 %1830
      %1832 = vrot.lane.b32.xlu0 %v1253, 16
      %v1833 = vpop.permute.xlu0 %1832
      %1834 = vrot.lane.b32.xlu0 %v1254, 16
      %v1835 = vpop.permute.xlu0 %1834
      %1836 = vrot.lane.b32.xlu0 %v1255, 16
      %v1837 = vpop.permute.xlu0 %1836
      %1838 = vrot.lane.b32.xlu0 %v1256, 16
      %v1839 = vpop.permute.xlu0 %1838
      %1840 = vrot.lane.b32.xlu0 %v1257, 16
      %v1841 = vpop.permute.xlu0 %1840
      %1842 = vrot.lane.b32.xlu0 %v1258, 16
      %v1843 = vpop.permute.xlu0 %1842
      %1844 = vrot.lane.b32.xlu0 %v1261, 16
      %v1845 = vpop.permute.xlu0 %1844
      %1846 = vrot.lane.b32.xlu0 %v1262, 16
      %v1847 = vpop.permute.xlu0 %1846
      %1848 = vrot.lane.b32.xlu0 %v1263, 16
      %v1849 = vpop.permute.xlu0 %1848
      %1850 = vrot.lane.b32.xlu0 %v1264, 16
      %v1851 = vpop.permute.xlu0 %1850
      %1852 = vrot.lane.b32.xlu0 %v1265, 16
      %v1853 = vpop.permute.xlu0 %1852
      %1854 = vrot.lane.b32.xlu0 %v1266, 16
      %v1855 = vpop.permute.xlu0 %1854
      %1856 = vrot.lane.b32.xlu0 %v1267, 16
      %v1857 = vpop.permute.xlu0 %1856
      %1858 = vrot.lane.b32.xlu0 %v1268, 16
      %v1859 = vpop.permute.xlu0 %1858
      %1860 = vrot.lane.b32.xlu0 %v1271, 16
      %v1861 = vpop.permute.xlu0 %1860
      %1862 = vrot.lane.b32.xlu0 %v1272, 16
      %v1863 = vpop.permute.xlu0 %1862
      %1864 = vrot.lane.b32.xlu0 %v1273, 16
      %v1865 = vpop.permute.xlu0 %1864
      %1866 = vrot.lane.b32.xlu0 %v1274, 16
      %v1867 = vpop.permute.xlu0 %1866
      %1868 = vrot.lane.b32.xlu0 %v1275, 16
      %v1869 = vpop.permute.xlu0 %1868
      %1870 = vrot.lane.b32.xlu0 %v1276, 16
      %v1871 = vpop.permute.xlu0 %1870
      %1872 = vrot.lane.b32.xlu0 %v1277, 16
      %v1873 = vpop.permute.xlu0 %1872
      %1874 = vrot.lane.b32.xlu0 %v1278, 16
      %v1875 = vpop.permute.xlu0 %1874
      %1876 = vrot.lane.b32.xlu0 %v1281, 16
      %v1877 = vpop.permute.xlu0 %1876
      %1878 = vrot.lane.b32.xlu0 %v1282, 16
      %v1879 = vpop.permute.xlu0 %1878
      %1880 = vrot.lane.b32.xlu0 %v1283, 16
      %v1881 = vpop.permute.xlu0 %1880
      %1882 = vrot.lane.b32.xlu0 %v1284, 16
      %v1883 = vpop.permute.xlu0 %1882
      %1884 = vrot.lane.b32.xlu0 %v1285, 16
      %v1885 = vpop.permute.xlu0 %1884
      %1886 = vrot.lane.b32.xlu0 %v1286, 16
      %v1887 = vpop.permute.xlu0 %1886
      %1888 = vrot.lane.b32.xlu0 %v1287, 16
      %v1889 = vpop.permute.xlu0 %1888
      %1890 = vrot.lane.b32.xlu0 %v1288, 16
      %v1891 = vpop.permute.xlu0 %1890
      %1925 = vrot.lane.b32.xlu0 %v1252, 40
      %v1926 = vpop.permute.xlu0 %1925
      %1927 = vrot.lane.b32.xlu0 %v1253, 40
      %v1928 = vpop.permute.xlu0 %1927
      %1929 = vrot.lane.b32.xlu0 %v1254, 40
      %v1930 = vpop.permute.xlu0 %1929
      %1931 = vrot.lane.b32.xlu0 %v1255, 40
      %v1932 = vpop.permute.xlu0 %1931
      %1933 = vrot.lane.b32.xlu0 %v1256, 40
      %v1934 = vpop.permute.xlu0 %1933
      %1935 = vrot.lane.b32.xlu0 %v1257, 40
      %v1936 = vpop.permute.xlu0 %1935
      %1937 = vrot.lane.b32.xlu0 %v1258, 40
      %v1938 = vpop.permute.xlu0 %1937
      %1939 = vrot.lane.b32.xlu0 %v1259, 40
      %v1940 = vpop.permute.xlu0 %1939
      %1941 = vrot.lane.b32.xlu0 %v1262, 40
      %v1942 = vpop.permute.xlu0 %1941
      %1943 = vrot.lane.b32.xlu0 %v1263, 40
      %v1944 = vpop.permute.xlu0 %1943
      %1945 = vrot.lane.b32.xlu0 %v1264, 40
      %v1946 = vpop.permute.xlu0 %1945
      %1947 = vrot.lane.b32.xlu0 %v1265, 40
      %v1948 = vpop.permute.xlu0 %1947
      %1949 = vrot.lane.b32.xlu0 %v1266, 40
      %v1950 = vpop.permute.xlu0 %1949
      %1951 = vrot.lane.b32.xlu0 %v1267, 40
      %v1952 = vpop.permute.xlu0 %1951
      %1953 = vrot.lane.b32.xlu0 %v1268, 40
      %v1954 = vpop.permute.xlu0 %1953
      %1955 = vrot.lane.b32.xlu0 %v1269, 40
      %v1956 = vpop.permute.xlu0 %1955
      %1957 = vrot.lane.b32.xlu0 %v1272, 40
      %v1958 = vpop.permute.xlu0 %1957
      %1959 = vrot.lane.b32.xlu0 %v1273, 40
      %v1960 = vpop.permute.xlu0 %1959
      %1961 = vrot.lane.b32.xlu0 %v1274, 40
      %v1962 = vpop.permute.xlu0 %1961
      %1963 = vrot.lane.b32.xlu0 %v1275, 40
      %v1964 = vpop.permute.xlu0 %1963
      %1965 = vrot.lane.b32.xlu0 %v1276, 40
      %v1966 = vpop.permute.xlu0 %1965
      %1967 = vrot.lane.b32.xlu0 %v1277, 40
      %v1968 = vpop.permute.xlu0 %1967
      %1969 = vrot.lane.b32.xlu0 %v1278, 40
      %v1970 = vpop.permute.xlu0 %1969
      %1971 = vrot.lane.b32.xlu0 %v1279, 40
      %v1972 = vpop.permute.xlu0 %1971
      %1973 = vrot.lane.b32.xlu0 %v1282, 40
      %v1974 = vpop.permute.xlu0 %1973
      %1975 = vrot.lane.b32.xlu0 %v1283, 40
      %v1976 = vpop.permute.xlu0 %1975
      %1977 = vrot.lane.b32.xlu0 %v1284, 40
      %v1978 = vpop.permute.xlu0 %1977
      %1979 = vrot.lane.b32.xlu0 %v1285, 40
      %v1980 = vpop.permute.xlu0 %1979
      %1981 = vrot.lane.b32.xlu0 %v1286, 40
      %v1982 = vpop.permute.xlu0 %1981
      %1983 = vrot.lane.b32.xlu0 %v1287, 40
      %v1984 = vpop.permute.xlu0 %1983
      %1985 = vrot.lane.b32.xlu0 %v1288, 40
      %v1986 = vpop.permute.xlu0 %1985
      %1987 = vrot.lane.b32.xlu0 %v1289, 40
      %v1988 = vpop.permute.xlu0 %1987
      %2022 = vrot.lane.b32.xlu0 %v1253, 64
      %v2023 = vpop.permute.xlu0 %2022
      %2024 = vrot.lane.b32.xlu0 %v1254, 64
      %v2025 = vpop.permute.xlu0 %2024
      %2026 = vrot.lane.b32.xlu0 %v1255, 64
      %v2027 = vpop.permute.xlu0 %2026
      %2028 = vrot.lane.b32.xlu0 %v1256, 64
      %v2029 = vpop.permute.xlu0 %2028
      %2030 = vrot.lane.b32.xlu0 %v1257, 64
      %v2031 = vpop.permute.xlu0 %2030
      %2032 = vrot.lane.b32.xlu0 %v1258, 64
      %v2033 = vpop.permute.xlu0 %2032
      %2034 = vrot.lane.b32.xlu0 %v1259, 64
      %v2035 = vpop.permute.xlu0 %2034
      %2036 = vrot.lane.b32.xlu0 %v1260, 64
      %v2037 = vpop.permute.xlu0 %2036
      %2038 = vrot.lane.b32.xlu0 %v1263, 64
      %v2039 = vpop.permute.xlu0 %2038
      %2040 = vrot.lane.b32.xlu0 %v1264, 64
      %v2041 = vpop.permute.xlu0 %2040
      %2042 = vrot.lane.b32.xlu0 %v1265, 64
      %v2043 = vpop.permute.xlu0 %2042
      %2044 = vrot.lane.b32.xlu0 %v1266, 64
      %v2045 = vpop.permute.xlu0 %2044
      %2046 = vrot.lane.b32.xlu0 %v1267, 64
      %v2047 = vpop.permute.xlu0 %2046
      %2048 = vrot.lane.b32.xlu0 %v1268, 64
      %v2049 = vpop.permute.xlu0 %2048
      %2050 = vrot.lane.b32.xlu0 %v1269, 64
      %v2051 = vpop.permute.xlu0 %2050
      %2052 = vrot.lane.b32.xlu0 %v1270, 64
      %v2053 = vpop.permute.xlu0 %2052
      %2054 = vrot.lane.b32.xlu0 %v1273, 64
      %v2055 = vpop.permute.xlu0 %2054
      %2056 = vrot.lane.b32.xlu0 %v1274, 64
      %v2057 = vpop.permute.xlu0 %2056
      %2058 = vrot.lane.b32.xlu0 %v1275, 64
      %v2059 = vpop.permute.xlu0 %2058
      %2060 = vrot.lane.b32.xlu0 %v1276, 64
      %v2061 = vpop.permute.xlu0 %2060
      %2062 = vrot.lane.b32.xlu0 %v1277, 64
      %v2063 = vpop.permute.xlu0 %2062
      %2064 = vrot.lane.b32.xlu0 %v1278, 64
      %v2065 = vpop.permute.xlu0 %2064
      %2066 = vrot.lane.b32.xlu0 %v1279, 64
      %v2067 = vpop.permute.xlu0 %2066
      %2068 = vrot.lane.b32.xlu0 %v1280, 64
      %v2069 = vpop.permute.xlu0 %2068
      %2070 = vrot.lane.b32.xlu0 %v1283, 64
      %v2071 = vpop.permute.xlu0 %2070
      %2072 = vrot.lane.b32.xlu0 %v1284, 64
      %v2073 = vpop.permute.xlu0 %2072
      %2074 = vrot.lane.b32.xlu0 %v1285, 64
      %v2075 = vpop.permute.xlu0 %2074
      %2076 = vrot.lane.b32.xlu0 %v1286, 64
      %v2077 = vpop.permute.xlu0 %2076
      %2078 = vrot.lane.b32.xlu0 %v1287, 64
      %v2079 = vpop.permute.xlu0 %2078
      %2080 = vrot.lane.b32.xlu0 %v1288, 64
      %v2081 = vpop.permute.xlu0 %2080
      %2082 = vrot.lane.b32.xlu0 %v1289, 64
      %v2083 = vpop.permute.xlu0 %2082
      %2084 = vrot.lane.b32.xlu0 %v1290, 64
      %v2085 = vpop.permute.xlu0 %2084
      %vm2118 = vcmask 195584
      %v2119 = vsel %vm2118, %v1231, %v1324
      %v2120 = vsel %vm2118, %v1232, %v1326
      %v2121 = vsel %vm2118, %v1233, %v1328
      %v2122 = vsel %vm2118, %v1234, %v1330
      %v2123 = vsel %vm2118, %v1235, %v1332
      %v2124 = vsel %vm2118, %v1236, %v1334
      %v2125 = vsel %vm2118, %v1237, %v1336
      %v2126 = vsel %vm2118, %v1238, %v1338
      %v2127 = vsel %vm2118, %v1241, %v1340
      %v2128 = vsel %vm2118, %v1242, %v1342
      %v2129 = vsel %vm2118, %v1243, %v1344
      %v2130 = vsel %vm2118, %v1244, %v1346
      %v2131 = vsel %vm2118, %v1245, %v1348
      %v2132 = vsel %vm2118, %v1246, %v1350
      %v2133 = vsel %vm2118, %v1247, %v1352
      %v2134 = vsel %vm2118, %v1248, %v1354
      %v2135 = vsel %vm2118, %v1251, %v1356
      %v2136 = vsel %vm2118, %v1252, %v1358
      %v2137 = vsel %vm2118, %v1253, %v1360
      %v2138 = vsel %vm2118, %v1254, %v1362
      %v2139 = vsel %vm2118, %v1255, %v1364
      %v2140 = vsel %vm2118, %v1256, %v1366
      %v2141 = vsel %vm2118, %v1257, %v1368
      %v2142 = vsel %vm2118, %v1258, %v1370
      %v2143 = vsel %vm2118, %v1261, %v1372
      %v2144 = vsel %vm2118, %v1262, %v1374
      %v2145 = vsel %vm2118, %v1263, %v1376
      %v2146 = vsel %vm2118, %v1264, %v1378
      %v2147 = vsel %vm2118, %v1265, %v1380
      %v2148 = vsel %vm2118, %v1266, %v1382
      %v2149 = vsel %vm2118, %v1267, %v1384
      %v2150 = vsel %vm2118, %v1268, %v1386
      %vm2151 = vcmask 392192
      %v2152 = vsel %vm2151, %v2119, %v1424
      %v2153 = vsel %vm2151, %v2120, %v1426
      %v2154 = vsel %vm2151, %v2121, %v1428
      %v2155 = vsel %vm2151, %v2122, %v1430
      %v2156 = vsel %vm2151, %v2123, %v1432
      %v2157 = vsel %vm2151, %v2124, %v1434
      %v2158 = vsel %vm2151, %v2125, %v1436
      %v2159 = vsel %vm2151, %v2126, %v1438
      %v2160 = vsel %vm2151, %v2127, %v1440
      %v2161 = vsel %vm2151, %v2128, %v1442
      %v2162 = vsel %vm2151, %v2129, %v1444
      %v2163 = vsel %vm2151, %v2130, %v1446
      %v2164 = vsel %vm2151, %v2131, %v1448
      %v2165 = vsel %vm2151, %v2132, %v1450
      %v2166 = vsel %vm2151, %v2133, %v1452
      %v2167 = vsel %vm2151, %v2134, %v1454
      %v2168 = vsel %vm2151, %v2135, %v1456
      %v2169 = vsel %vm2151, %v2136, %v1458
      %v2170 = vsel %vm2151, %v2137, %v1460
      %v2171 = vsel %vm2151, %v2138, %v1462
      %v2172 = vsel %vm2151, %v2139, %v1464
      %v2173 = vsel %vm2151, %v2140, %v1466
      %v2174 = vsel %vm2151, %v2141, %v1468
      %v2175 = vsel %vm2151, %v2142, %v1470
      %v2176 = vsel %vm2151, %v2143, %v1472
      %v2177 = vsel %vm2151, %v2144, %v1474
      %v2178 = vsel %vm2151, %v2145, %v1476
      %v2179 = vsel %vm2151, %v2146, %v1478
      %v2180 = vsel %vm2151, %v2147, %v1480
      %v2181 = vsel %vm2151, %v2148, %v1482
      %v2182 = vsel %vm2151, %v2149, %v1484
      %v2183 = vsel %vm2151, %v2150, %v1486
      %vm2184 = vcmask 588800
      %v2185 = vsel %vm2184, %v2152, %v1531
      %v2186 = vsel %vm2184, %v2153, %v1533
      %v2187 = vsel %vm2184, %v2154, %v1535
      %v2188 = vsel %vm2184, %v2155, %v1537
      %v2189 = vsel %vm2184, %v2156, %v1539
      %v2190 = vsel %vm2184, %v2157, %v1541
      %v2191 = vsel %vm2184, %v2158, %v1543
      %v2192 = vsel %vm2184, %v2159, %v1545
      %v2193 = vsel %vm2184, %v2160, %v1547
      %v2194 = vsel %vm2184, %v2161, %v1549
      %v2195 = vsel %vm2184, %v2162, %v1551
      %v2196 = vsel %vm2184, %v2163, %v1553
      %v2197 = vsel %vm2184, %v2164, %v1555
      %v2198 = vsel %vm2184, %v2165, %v1557
      %v2199 = vsel %vm2184, %v2166, %v1559
      %v2200 = vsel %vm2184, %v2167, %v1561
      %v2201 = vsel %vm2184, %v2168, %v1563
      %v2202 = vsel %vm2184, %v2169, %v1565
      %v2203 = vsel %vm2184, %v2170, %v1567
      %v2204 = vsel %vm2184, %v2171, %v1569
      %v2205 = vsel %vm2184, %v2172, %v1571
      %v2206 = vsel %vm2184, %v2173, %v1573
      %v2207 = vsel %vm2184, %v2174, %v1575
      %v2208 = vsel %vm2184, %v2175, %v1577
      %v2209 = vsel %vm2184, %v2176, %v1579
      %v2210 = vsel %vm2184, %v2177, %v1581
      %v2211 = vsel %vm2184, %v2178, %v1583
      %v2212 = vsel %vm2184, %v2179, %v1585
      %v2213 = vsel %vm2184, %v2180, %v1587
      %v2214 = vsel %vm2184, %v2181, %v1589
      %v2215 = vsel %vm2184, %v2182, %v1591
      %v2216 = vsel %vm2184, %v2183, %v1593
      %vm2217 = vcmask 785408
      %v2218 = vsel %vm2217, %v2185, %v1628
      %v2219 = vsel %vm2217, %v2186, %v1630
      %v2220 = vsel %vm2217, %v2187, %v1632
      %v2221 = vsel %vm2217, %v2188, %v1634
      %v2222 = vsel %vm2217, %v2189, %v1636
      %v2223 = vsel %vm2217, %v2190, %v1638
      %v2224 = vsel %vm2217, %v2191, %v1640
      %v2225 = vsel %vm2217, %v2192, %v1642
      %v2226 = vsel %vm2217, %v2193, %v1644
      %v2227 = vsel %vm2217, %v2194, %v1646
      %v2228 = vsel %vm2217, %v2195, %v1648
      %v2229 = vsel %vm2217, %v2196, %v1650
      %v2230 = vsel %vm2217, %v2197, %v1652
      %v2231 = vsel %vm2217, %v2198, %v1654
      %v2232 = vsel %vm2217, %v2199, %v1656
      %v2233 = vsel %vm2217, %v2200, %v1658
      %v2234 = vsel %vm2217, %v2201, %v1660
      %v2235 = vsel %vm2217, %v2202, %v1662
      %v2236 = vsel %vm2217, %v2203, %v1664
      %v2237 = vsel %vm2217, %v2204, %v1666
      %v2238 = vsel %vm2217, %v2205, %v1668
      %v2239 = vsel %vm2217, %v2206, %v1670
      %v2240 = vsel %vm2217, %v2207, %v1672
      %v2241 = vsel %vm2217, %v2208, %v1674
      %v2242 = vsel %vm2217, %v2209, %v1676
      %v2243 = vsel %vm2217, %v2210, %v1678
      %v2244 = vsel %vm2217, %v2211, %v1680
      %v2245 = vsel %vm2217, %v2212, %v1682
      %v2246 = vsel %vm2217, %v2213, %v1684
      %v2247 = vsel %vm2217, %v2214, %v1686
      %v2248 = vsel %vm2217, %v2215, %v1688
      %v2249 = vsel %vm2217, %v2216, %v1690
      %vm2250 = vcmask 982016
      %v2251 = vsel %vm2250, %v2218, %v1725
      %v2252 = vsel %vm2250, %v2219, %v1727
      %v2253 = vsel %vm2250, %v2220, %v1729
      %v2254 = vsel %vm2250, %v2221, %v1731
      %v2255 = vsel %vm2250, %v2222, %v1733
      %v2256 = vsel %vm2250, %v2223, %v1735
      %v2257 = vsel %vm2250, %v2224, %v1737
      %v2258 = vsel %vm2250, %v2225, %v1739
      %v2259 = vsel %vm2250, %v2226, %v1741
      %v2260 = vsel %vm2250, %v2227, %v1743
      %v2261 = vsel %vm2250, %v2228, %v1745
      %v2262 = vsel %vm2250, %v2229, %v1747
      %v2263 = vsel %vm2250, %v2230, %v1749
      %v2264 = vsel %vm2250, %v2231, %v1751
      %v2265 = vsel %vm2250, %v2232, %v1753
      %v2266 = vsel %vm2250, %v2233, %v1755
      %v2267 = vsel %vm2250, %v2234, %v1757
      %v2268 = vsel %vm2250, %v2235, %v1759
      %v2269 = vsel %vm2250, %v2236, %v1761
      %v2270 = vsel %vm2250, %v2237, %v1763
      %v2271 = vsel %vm2250, %v2238, %v1765
      %v2272 = vsel %vm2250, %v2239, %v1767
      %v2273 = vsel %vm2250, %v2240, %v1769
      %v2274 = vsel %vm2250, %v2241, %v1771
      %v2275 = vsel %vm2250, %v2242, %v1773
      %v2276 = vsel %vm2250, %v2243, %v1775
      %v2277 = vsel %vm2250, %v2244, %v1777
      %v2278 = vsel %vm2250, %v2245, %v1779
      %v2279 = vsel %vm2250, %v2246, %v1781
      %v2280 = vsel %vm2250, %v2247, %v1783
      %v2281 = vsel %vm2250, %v2248, %v1785
      %v2282 = vsel %vm2250, %v2249, %v1787
      %v2283 = vsel %vm1230, %v1725, %v1829
      %v2284 = vsel %vm1230, %v1727, %v1831
      %v2285 = vsel %vm1230, %v1729, %v1833
      %v2286 = vsel %vm1230, %v1731, %v1835
      %v2287 = vsel %vm1230, %v1733, %v1837
      %v2288 = vsel %vm1230, %v1735, %v1839
      %v2289 = vsel %vm1230, %v1737, %v1841
      %v2290 = vsel %vm1230, %v1739, %v1843
      %v2291 = vsel %vm1230, %v1741, %v1845
      %v2292 = vsel %vm1230, %v1743, %v1847
      %v2293 = vsel %vm1230, %v1745, %v1849
      %v2294 = vsel %vm1230, %v1747, %v1851
      %v2295 = vsel %vm1230, %v1749, %v1853
      %v2296 = vsel %vm1230, %v1751, %v1855
      %v2297 = vsel %vm1230, %v1753, %v1857
      %v2298 = vsel %vm1230, %v1755, %v1859
      %v2299 = vsel %vm1230, %v1757, %v1861
      %v2300 = vsel %vm1230, %v1759, %v1863
      %v2301 = vsel %vm1230, %v1761, %v1865
      %v2302 = vsel %vm1230, %v1763, %v1867
      %v2303 = vsel %vm1230, %v1765, %v1869
      %v2304 = vsel %vm1230, %v1767, %v1871
      %v2305 = vsel %vm1230, %v1769, %v1873
      %v2306 = vsel %vm1230, %v1771, %v1875
      %v2307 = vsel %vm1230, %v1773, %v1877
      %v2308 = vsel %vm1230, %v1775, %v1879
      %v2309 = vsel %vm1230, %v1777, %v1881
      %v2310 = vsel %vm1230, %v1779, %v1883
      %v2311 = vsel %vm1230, %v1781, %v1885
      %v2312 = vsel %vm1230, %v1783, %v1887
      %v2313 = vsel %vm1230, %v1785, %v1889
      %v2314 = vsel %vm1230, %v1787, %v1891
      %vm2315 = vcmask 326656
      %v2316 = vsel %vm2315, %v2283, %v1926
      %v2317 = vsel %vm2315, %v2284, %v1928
      %v2318 = vsel %vm2315, %v2285, %v1930
      %v2319 = vsel %vm2315, %v2286, %v1932
      %v2320 = vsel %vm2315, %v2287, %v1934
      %v2321 = vsel %vm2315, %v2288, %v1936
      %v2322 = vsel %vm2315, %v2289, %v1938
      %v2323 = vsel %vm2315, %v2290, %v1940
      %v2324 = vsel %vm2315, %v2291, %v1942
      %v2325 = vsel %vm2315, %v2292, %v1944
      %v2326 = vsel %vm2315, %v2293, %v1946
      %v2327 = vsel %vm2315, %v2294, %v1948
      %v2328 = vsel %vm2315, %v2295, %v1950
      %v2329 = vsel %vm2315, %v2296, %v1952
      %v2330 = vsel %vm2315, %v2297, %v1954
      %v2331 = vsel %vm2315, %v2298, %v1956
      %v2332 = vsel %vm2315, %v2299, %v1958
      %v2333 = vsel %vm2315, %v2300, %v1960
      %v2334 = vsel %vm2315, %v2301, %v1962
      %v2335 = vsel %vm2315, %v2302, %v1964
      %v2336 = vsel %vm2315, %v2303, %v1966
      %v2337 = vsel %vm2315, %v2304, %v1968
      %v2338 = vsel %vm2315, %v2305, %v1970
      %v2339 = vsel %vm2315, %v2306, %v1972
      %v2340 = vsel %vm2315, %v2307, %v1974
      %v2341 = vsel %vm2315, %v2308, %v1976
      %v2342 = vsel %vm2315, %v2309, %v1978
      %v2343 = vsel %vm2315, %v2310, %v1980
      %v2344 = vsel %vm2315, %v2311, %v1982
      %v2345 = vsel %vm2315, %v2312, %v1984
      %v2346 = vsel %vm2315, %v2313, %v1986
      %v2347 = vsel %vm2315, %v2314, %v1988
      %vm2348 = vcmask 523264
      %v2349 = vsel %vm2348, %v2316, %v2023
      %v2350 = vsel %vm2348, %v2317, %v2025
      %v2351 = vsel %vm2348, %v2318, %v2027
      %v2352 = vsel %vm2348, %v2319, %v2029
      %v2353 = vsel %vm2348, %v2320, %v2031
      %v2354 = vsel %vm2348, %v2321, %v2033
      %v2355 = vsel %vm2348, %v2322, %v2035
      %v2356 = vsel %vm2348, %v2323, %v2037
      %v2357 = vsel %vm2348, %v2324, %v2039
      %v2358 = vsel %vm2348, %v2325, %v2041
      %v2359 = vsel %vm2348, %v2326, %v2043
      %v2360 = vsel %vm2348, %v2327, %v2045
      %v2361 = vsel %vm2348, %v2328, %v2047
      %v2362 = vsel %vm2348, %v2329, %v2049
      %v2363 = vsel %vm2348, %v2330, %v2051
      %v2364 = vsel %vm2348, %v2331, %v2053
      %v2365 = vsel %vm2348, %v2332, %v2055
      %v2366 = vsel %vm2348, %v2333, %v2057
      %v2367 = vsel %vm2348, %v2334, %v2059
      %v2368 = vsel %vm2348, %v2335, %v2061
      %v2369 = vsel %vm2348, %v2336, %v2063
      %v2370 = vsel %vm2348, %v2337, %v2065
      %v2371 = vsel %vm2348, %v2338, %v2067
      %v2372 = vsel %vm2348, %v2339, %v2069
      %v2373 = vsel %vm2348, %v2340, %v2071
      %v2374 = vsel %vm2348, %v2341, %v2073
      %v2375 = vsel %vm2348, %v2342, %v2075
      %v2376 = vsel %vm2348, %v2343, %v2077
      %v2377 = vsel %vm2348, %v2344, %v2079
      %v2378 = vsel %vm2348, %v2345, %v2081
      %v2379 = vsel %vm2348, %v2346, %v2083
      %v2380 = vsel %vm2348, %v2347, %v2085
      %v2381 = vld [vmem:[%s1] sm:$0xff]
      %v2382 = vld [vmem:[%s1 + $0x8] sm:$0xff]
      %v2383 = vld [vmem:[%s1 + $0x10] sm:$0xff]
      %v2384 = vld [vmem:[%s1 + $0x18] sm:$0xff]
      %v2385 = vld [vmem:[%s1 + $0x20] sm:$0xff]
      %v2386 = vld [vmem:[%s1 + $0x28] sm:$0xff]
      %v2387 = vld [vmem:[%s1 + $0x30] sm:$0xff]
      %v2388 = vld [vmem:[%s1 + $0x38] sm:$0xff]
      %v2389 = vld [vmem:[%s1 + $0x40] sm:$0xff]
      %v2390 = vld [vmem:[%s1 + $0x48] sm:$0xff]
      %v2391 = vld [vmem:[%s1 + $0x50] sm:$0xff]
      %v2392 = vld [vmem:[%s1 + $0x58] sm:$0xff]
      %v2393 = vld [vmem:[%s1 + $0x60] sm:$0xff]
      %v2394 = vld [vmem:[%s1 + $0x68] sm:$0xff]
      %v2395 = vld [vmem:[%s1 + $0x70] sm:$0xff]
      %v2396 = vld [vmem:[%s1 + $0x78] sm:$0xff]
      %v2397 = vld [vmem:[%s1 + $0x80] sm:$0xff]
      %v2398 = vld [vmem:[%s1 + $0x88] sm:$0xff]
      %v2399 = vld [vmem:[%s1 + $0x90] sm:$0xff]
      %v2400 = vld [vmem:[%s1 + $0x98] sm:$0xff]
      %v2401 = vld [vmem:[%s1 + $0xa0] sm:$0xff]
      %v2402 = vld [vmem:[%s1 + $0xa8] sm:$0xff]
      %v2403 = vld [vmem:[%s1 + $0xb0] sm:$0xff]
      %v2404 = vld [vmem:[%s1 + $0xb8] sm:$0xff]
      %v2405 = vld [vmem:[%s1 + $0xc0] sm:$0xff]
      %v2406 = vld [vmem:[%s1 + $0xc8] sm:$0xff]
      %v2407 = vld [vmem:[%s1 + $0xd0] sm:$0xff]
      %v2408 = vld [vmem:[%s2] sm:$0x1]
      %v2410 = vlaneseq
      %v2411 = vshrl.u32 %v2410, 7
      %v2412 = vsub.s32 0, %v2411
      %v2413 = vrot.slane %v2408, %v2412
      %vm2415 = vcmask 719872
      %v2417 = vsel %vm2415, %v2349, 0
      %v2420 = vsel %vm2415, %v2350, 0
      %v2423 = vsel %vm2415, %v2351, 0
      %v2426 = vsel %vm2415, %v2352, 0
      %v2429 = vsel %vm2415, %v2353, 0
      %v2432 = vsel %vm2415, %v2354, 0
      %v2435 = vsel %vm2415, %v2355, 0
      %v2438 = vsel %vm2415, %v2356, 0
      %v2441 = vsel %vm2415, %v2357, 0
      %v2444 = vsel %vm2415, %v2358, 0
      %v2447 = vsel %vm2415, %v2359, 0
      %v2450 = vsel %vm2415, %v2360, 0
      %v2453 = vsel %vm2415, %v2361, 0
      %v2456 = vsel %vm2415, %v2362, 0
      %v2459 = vsel %vm2415, %v2363, 0
      %v2462 = vsel %vm2415, %v2364, 0
      %v2465 = vsel %vm2415, %v2365, 0
      %v2468 = vsel %vm2415, %v2366, 0
      %v2471 = vsel %vm2415, %v2367, 0
      %v2474 = vsel %vm2415, %v2368, 0
      %v2477 = vsel %vm2415, %v2369, 0
      %v2480 = vsel %vm2415, %v2370, 0
      %v2483 = vsel %vm2415, %v2371, 0
      %v2486 = vsel %vm2415, %v2372, 0
      %v2489 = vsel %vm2415, %v2373, 0
      %v2492 = vsel %vm2415, %v2374, 0
      %v2495 = vsel %vm2415, %v2375, 0
      %v2498 = vsel %vm2415, %v2376, 0
      %v2501 = vsel %vm2415, %v2377, 0
      %v2504 = vsel %vm2415, %v2378, 0
      %v2507 = vsel %vm2415, %v2379, 0
      %v2510 = vsel %vm2415, %v2380, 0
      %2512 = vmatprep.subr.mxu0 0.0
      %2513 = vmatpush1.msra.mxu0 %v2396
      %2514 = vmatprep.subr.mxu0 0.0
      %2515 = vmatpush1.msra.mxu0 %v2395
      %2516 = vmatprep.subr.mxu0 0.0
      %2517 = vmatpush1.msra.mxu0 %v2394
      %2518 = vmatprep.subr.mxu0 0.0
      %2519 = vmatpush1.msra.mxu0 %v2393
      %2520 = vmatprep.subr.mxu0 0.0
      %2521 = vmatpush1.msra.mxu0 %v2392
      %2522 = vmatprep.subr.mxu0 0.0
      %2523 = vmatpush1.msra.mxu0 %v2391
      %2524 = vmatprep.subr.mxu0 0.0
      %2525 = vmatpush1.msra.mxu0 %v2390
      %2526 = vmatprep.subr.mxu0 0.0
      %2527 = vmatpush1.msra.mxu0 %v2389
      %2528 = vmatprep.subr.mxu0 0.0
      %2529 = vmatpush1.msra.mxu0 %v2388
      %2530 = vmatprep.subr.mxu0 0.0
      %2531 = vmatpush1.msra.mxu0 %v2387
      %2532 = vmatprep.subr.mxu0 0.0
      %2533 = vmatpush1.msra.mxu0 %v2386
      %2534 = vmatprep.subr.mxu0 0.0
      %2535 = vmatpush1.msra.mxu0 %v2385
      %2536 = vmatprep.subr.mxu0 0.0
      %2537 = vmatpush1.msra.mxu0 %v2384
      %2538 = vmatprep.subr.mxu0 0.0
      %2539 = vmatpush1.msra.mxu0 %v2383
      %2540 = vmatprep.subr.mxu0 0.0
      %2541 = vmatpush1.msra.mxu0 %v2382
      %2542 = vmatprep.subr.mxu0 0.0
      %2543 = vmatpush1.msra.mxu0 %v2381
      %2544 = vmatprep.subr.mxu0 0.0
      %2545 = vmatpush2.msra.mxu0 0.0
      %2546 = vmatprep.subr.mxu0 0.0
      %2547 = vmatpush2.msra.mxu0 0.0
      %2548 = vmatprep.subr.mxu0 0.0
      %2549 = vmatpush2.msra.mxu0 0.0
      %2550 = vmatprep.subr.mxu0 0.0
      %2551 = vmatpush2.msra.mxu0 0.0
      %2552 = vmatprep.subr.mxu0 0.0
      %2553 = vmatpush2.msra.mxu0 0.0
      %2554 = vmatprep.subr.mxu0 0.0
      %2555 = vmatpush2.msra.mxu0 %v2407
      %2556 = vmatprep.subr.mxu0 0.0
      %2557 = vmatpush2.msra.mxu0 %v2406
      %2558 = vmatprep.subr.mxu0 0.0
      %2559 = vmatpush2.msra.mxu0 %v2405
      %2560 = vmatprep.subr.mxu0 0.0
      %2561 = vmatpush2.msra.mxu0 %v2404
      %2562 = vmatprep.subr.mxu0 0.0
      %2563 = vmatpush2.msra.mxu0 %v2403
      %2564 = vmatprep.subr.mxu0 0.0
      %2565 = vmatpush2.msra.mxu0 %v2402
      %2566 = vmatprep.subr.mxu0 0.0
      %2567 = vmatpush2.msra.mxu0 %v2401
      %2568 = vmatprep.subr.mxu0 0.0
      %2569 = vmatpush2.msra.mxu0 %v2400
      %2570 = vmatprep.subr.mxu0 0.0
      %2571 = vmatpush2.msra.mxu0 %v2399
      %2572 = vmatprep.subr.mxu0 0.0
      %2573 = vmatpush2.msra.mxu0 %v2398
      %2574 = vmatprep.subr.mxu0 0.0
      %2575 = vmatpush2.msra.mxu0 %v2397
      %2576 = vmatprep.mubr.f32.mxu0 %v2417
      %2577 = vmatmul.mubr.f32.gmra.mxu0 %v2251
      %v2578 = vpop.f32.mrf.mxu0
      %v2579 = vadd.f32 %v2413, %v2578
      %v2580 = vpop.f32.mrf.mxu0
      %2581 = vmatprep.mubr.f32.mxu0 %v2420
      %2582 = vmatmul.mubr.f32.gmra.mxu0 %v2252
      %v2583 = vpop.f32.mrf.mxu0
      %v2584 = vadd.f32 %v2413, %v2583
      %v2585 = vpop.f32.mrf.mxu0
      %2586 = vmatprep.mubr.f32.mxu0 %v2423
      %2587 = vmatmul.mubr.f32.gmra.mxu0 %v2253
      %v2588 = vpop.f32.mrf.mxu0
      %v2589 = vadd.f32 %v2413, %v2588
      %v2590 = vpop.f32.mrf.mxu0
      %2591 = vmatprep.mubr.f32.mxu0 %v2426
      %2592 = vmatmul.mubr.f32.gmra.mxu0 %v2254
      %v2593 = vpop.f32.mrf.mxu0
      %v2594 = vadd.f32 %v2413, %v2593
      %v2595 = vpop.f32.mrf.mxu0
      %2596 = vmatprep.mubr.f32.mxu0 %v2429
      %2597 = vmatmul.mubr.f32.gmra.mxu0 %v2255
      %v2598 = vpop.f32.mrf.mxu0
      %v2599 = vadd.f32 %v2413, %v2598
      %v2600 = vpop.f32.mrf.mxu0
      %2601 = vmatprep.mubr.f32.mxu0 %v2432
      %2602 = vmatmul.mubr.f32.gmra.mxu0 %v2256
      %v2603 = vpop.f32.mrf.mxu0
      %v2604 = vadd.f32 %v2413, %v2603
      %v2605 = vpop.f32.mrf.mxu0
      %2606 = vmatprep.mubr.f32.mxu0 %v2435
      %2607 = vmatmul.mubr.f32.gmra.mxu0 %v2257
      %v2608 = vpop.f32.mrf.mxu0
      %v2609 = vadd.f32 %v2413, %v2608
      %v2610 = vpop.f32.mrf.mxu0
      %2611 = vmatprep.mubr.f32.mxu0 %v2438
      %2612 = vmatmul.mubr.f32.gmra.mxu0 %v2258
      %v2613 = vpop.f32.mrf.mxu0
      %v2614 = vadd.f32 %v2413, %v2613
      %v2615 = vpop.f32.mrf.mxu0
      %2616 = vmatprep.mubr.f32.mxu0 %v2441
      %2617 = vmatmul.mubr.f32.gmra.mxu0 %v2259
      %v2618 = vpop.f32.mrf.mxu0
      %v2619 = vadd.f32 %v2413, %v2618
      %v2620 = vpop.f32.mrf.mxu0
      %2621 = vmatprep.mubr.f32.mxu0 %v2444
      %2622 = vmatmul.mubr.f32.gmra.mxu0 %v2260
      %v2623 = vpop.f32.mrf.mxu0
      %v2624 = vadd.f32 %v2413, %v2623
      %v2625 = vpop.f32.mrf.mxu0
      %2626 = vmatprep.mubr.f32.mxu0 %v2447
      %2627 = vmatmul.mubr.f32.gmra.mxu0 %v2261
      %v2628 = vpop.f32.mrf.mxu0
      %v2629 = vadd.f32 %v2413, %v2628
      %v2630 = vpop.f32.mrf.mxu0
      %2631 = vmatprep.mubr.f32.mxu0 %v2450
      %2632 = vmatmul.mubr.f32.gmra.mxu0 %v2262
      %v2633 = vpop.f32.mrf.mxu0
      %v2634 = vadd.f32 %v2413, %v2633
      %v2635 = vpop.f32.mrf.mxu0
      %2636 = vmatprep.mubr.f32.mxu0 %v2453
      %2637 = vmatmul.mubr.f32.gmra.mxu0 %v2263
      %v2638 = vpop.f32.mrf.mxu0
      %v2639 = vadd.f32 %v2413, %v2638
      %v2640 = vpop.f32.mrf.mxu0
      %2641 = vmatprep.mubr.f32.mxu0 %v2456
      %2642 = vmatmul.mubr.f32.gmra.mxu0 %v2264
      %v2643 = vpop.f32.mrf.mxu0
      %v2644 = vadd.f32 %v2413, %v2643
      %v2645 = vpop.f32.mrf.mxu0
      %2646 = vmatprep.mubr.f32.mxu0 %v2459
      %2647 = vmatmul.mubr.f32.gmra.mxu0 %v2265
      %v2648 = vpop.f32.mrf.mxu0
      %v2649 = vadd.f32 %v2413, %v2648
      %v2650 = vpop.f32.mrf.mxu0
      %2651 = vmatprep.mubr.f32.mxu0 %v2462
      %2652 = vmatmul.mubr.f32.gmra.mxu0 %v2266
      %v2653 = vpop.f32.mrf.mxu0
      %v2654 = vadd.f32 %v2413, %v2653
      %v2655 = vpop.f32.mrf.mxu0
      %2656 = vmatprep.mubr.f32.mxu0 %v2465
      %2657 = vmatmul.mubr.f32.gmra.mxu0 %v2267
      %v2658 = vpop.f32.mrf.mxu0
      %v2659 = vadd.f32 %v2413, %v2658
      %v2660 = vpop.f32.mrf.mxu0
      %2661 = vmatprep.mubr.f32.mxu0 %v2468
      %2662 = vmatmul.mubr.f32.gmra.mxu0 %v2268
      %v2663 = vpop.f32.mrf.mxu0
      %v2664 = vadd.f32 %v2413, %v2663
      %v2665 = vpop.f32.mrf.mxu0
      %2666 = vmatprep.mubr.f32.mxu0 %v2471
      %2667 = vmatmul.mubr.f32.gmra.mxu0 %v2269
      %v2668 = vpop.f32.mrf.mxu0
      %v2669 = vadd.f32 %v2413, %v2668
      %v2670 = vpop.f32.mrf.mxu0
      %2671 = vmatprep.mubr.f32.mxu0 %v2474
      %2672 = vmatmul.mubr.f32.gmra.mxu0 %v2270
      %v2673 = vpop.f32.mrf.mxu0
      %v2674 = vadd.f32 %v2413, %v2673
      %v2675 = vpop.f32.mrf.mxu0
      %2676 = vmatprep.mubr.f32.mxu0 %v2477
      %2677 = vmatmul.mubr.f32.gmra.mxu0 %v2271
      %v2678 = vpop.f32.mrf.mxu0
      %v2679 = vadd.f32 %v2413, %v2678
      %v2680 = vpop.f32.mrf.mxu0
      %2681 = vmatprep.mubr.f32.mxu0 %v2480
      %2682 = vmatmul.mubr.f32.gmra.mxu0 %v2272
      %v2683 = vpop.f32.mrf.mxu0
      %v2684 = vadd.f32 %v2413, %v2683
      %v2685 = vpop.f32.mrf.mxu0
      %2686 = vmatprep.mubr.f32.mxu0 %v2483
      %2687 = vmatmul.mubr.f32.gmra.mxu0 %v2273
      %v2688 = vpop.f32.mrf.mxu0
      %v2689 = vadd.f32 %v2413, %v2688
      %v2690 = vpop.f32.mrf.mxu0
      %2691 = vmatprep.mubr.f32.mxu0 %v2486
      %2692 = vmatmul.mubr.f32.gmra.mxu0 %v2274
      %v2693 = vpop.f32.mrf.mxu0
      %v2694 = vadd.f32 %v2413, %v2693
      %v2695 = vpop.f32.mrf.mxu0
      %2696 = vmatprep.mubr.f32.mxu0 %v2489
      %2697 = vmatmul.mubr.f32.gmra.mxu0 %v2275
      %v2698 = vpop.f32.mrf.mxu0
      %v2699 = vadd.f32 %v2413, %v2698
      %v2700 = vpop.f32.mrf.mxu0
      %2701 = vmatprep.mubr.f32.mxu0 %v2492
      %2702 = vmatmul.mubr.f32.gmra.mxu0 %v2276
      %v2703 = vpop.f32.mrf.mxu0
      %v2704 = vadd.f32 %v2413, %v2703
      %v2705 = vpop.f32.mrf.mxu0
      %2706 = vmatprep.mubr.f32.mxu0 %v2495
      %2707 = vmatmul.mubr.f32.gmra.mxu0 %v2277
      %v2708 = vpop.f32.mrf.mxu0
      %v2709 = vadd.f32 %v2413, %v2708
      %v2710 = vpop.f32.mrf.mxu0
      %2711 = vmatprep.mubr.f32.mxu0 %v2498
      %2712 = vmatmul.mubr.f32.gmra.mxu0 %v2278
      %v2713 = vpop.f32.mrf.mxu0
      %v2714 = vadd.f32 %v2413, %v2713
      %v2715 = vpop.f32.mrf.mxu0
      %2716 = vmatprep.mubr.f32.mxu0 %v2501
      %2717 = vmatmul.mubr.f32.gmra.mxu0 %v2279
      %v2718 = vpop.f32.mrf.mxu0
      %v2719 = vadd.f32 %v2413, %v2718
      %v2720 = vpop.f32.mrf.mxu0
      %2721 = vmatprep.mubr.f32.mxu0 %v2504
      %2722 = vmatmul.mubr.f32.gmra.mxu0 %v2280
      %v2723 = vpop.f32.mrf.mxu0
      %v2724 = vadd.f32 %v2413, %v2723
      %v2725 = vpop.f32.mrf.mxu0
      %2726 = vmatprep.mubr.f32.mxu0 %v2507
      %2727 = vmatmul.mubr.f32.gmra.mxu0 %v2281
      %v2728 = vpop.f32.mrf.mxu0
      %v2729 = vadd.f32 %v2413, %v2728
      %v2730 = vpop.f32.mrf.mxu0
      %2731 = vmatprep.mubr.f32.mxu0 %v2510
      %2732 = vmatmul.mubr.f32.gmra.mxu0 %v2282
      %v2733 = vpop.f32.mrf.mxu0
      %v2734 = vadd.f32 %v2413, %v2733
      %v2735 = vpop.f32.mrf.mxu0
      %2736 = vdwg.mxu0
      %2737 = vst [vmem:[%s204] sm:$0xff] %v2579
      %2738 = vst [vmem:[%s204 + $0x8] sm:$0xff] %v2584
      %2739 = vst [vmem:[%s204 + $0x10] sm:$0xff] %v2589
      %2740 = vst [vmem:[%s204 + $0x18] sm:$0xff] %v2594
      %2741 = vst [vmem:[%s204 + $0x20] sm:$0xff] %v2599
      %2742 = vst [vmem:[%s204 + $0x28] sm:$0xff] %v2604
      %2743 = vst [vmem:[%s204 + $0x30] sm:$0xff] %v2609
      %2744 = vst [vmem:[%s204 + $0x38] sm:$0xff] %v2614
      %2745 = vst [vmem:[%s204 + $0x40] sm:$0xff] %v2619
      %2746 = vst [vmem:[%s204 + $0x48] sm:$0xff] %v2624
      %2747 = vst [vmem:[%s204 + $0x50] sm:$0xff] %v2629
      %2748 = vst [vmem:[%s204 + $0x58] sm:$0xff] %v2634
      %2749 = vst [vmem:[%s204 + $0x60] sm:$0xff] %v2639
      %2750 = vst [vmem:[%s204 + $0x68] sm:$0xff] %v2644
      %2751 = vst [vmem:[%s204 + $0x70] sm:$0xff] %v2649
      %2752 = vst [vmem:[%s204 + $0x78] sm:$0xff] %v2654
      %2753 = vst [vmem:[%s204 + $0x80] sm:$0xff] %v2659
      %2754 = vst [vmem:[%s204 + $0x88] sm:$0xff] %v2664
      %2755 = vst [vmem:[%s204 + $0x90] sm:$0xff] %v2669
      %2756 = vst [vmem:[%s204 + $0x98] sm:$0xff] %v2674
      %2757 = vst [vmem:[%s204 + $0xa0] sm:$0xff] %v2679
      %2758 = vst [vmem:[%s204 + $0xa8] sm:$0xff] %v2684
      %2759 = vst [vmem:[%s204 + $0xb0] sm:$0xff] %v2689
      %2760 = vst [vmem:[%s204 + $0xb8] sm:$0xff] %v2694
      %2761 = vst [vmem:[%s204 + $0xc0] sm:$0xff] %v2699
      %2762 = vst [vmem:[%s204 + $0xc8] sm:$0xff] %v2704
      %2763 = vst [vmem:[%s204 + $0xd0] sm:$0xff] %v2709
      %2764 = vst [vmem:[%s204 + $0xd8] sm:$0xff] %v2714
      %2765 = vst [vmem:[%s204 + $0xe0] sm:$0xff] %v2719
      %2766 = vst [vmem:[%s204 + $0xe8] sm:$0xff] %v2724
      %2767 = vst [vmem:[%s204 + $0xf0] sm:$0xff] %v2729
      %2768 = vst [vmem:[%s204 + $0xf8] sm:$0xff] %v2734
      %s2769 = smul.u32 %s18, 2
      %s2770 = sadd.s32 %s2769, %s19
      %p2771 = scmp.lt.s32.totalorder %s2770, 3
      %s2772 = scalar_select %p2771, %s2770, 3
      %s2773 = smul.addr %s2772, 32
      %s2774 = smul.addr %s2773, 8
      %s2775 = scalar_lea.vmem %s3, %s2774
      // Predicated region
      $region33: #{cnn_layer3d_plain.1} parent=31 // pred_check
        %p2776 = pneg %p120
      $region34: #{cnn_layer3d_plain.1} parent=31 // pred_check_branch
        %2778 = sbr.rel (%p2776) target = $region36
      $region35: #{cnn_layer3d_plain.1} parent=31 // pred_region
        %s2779 = smul.u32 %s18, 2
        %s2780 = sadd.s32 %s2779, %s19
      $region36: #{cnn_layer3d_plain.1} parent=31 // pred_fallthru
        _
    $region32: #{cnn_layer3d_plain.1} parent=5 // pred_fallthru
      _
    %p2781 = scmp.le.s32.totalorder 2, %s9
    // Predicated region
    $region37: #{cnn_layer3d_plain.1} parent=5 // pred_check
      %p2782 = pneg %p2781
    $region38: #{cnn_layer3d_plain.1} parent=5 // pred_check_branch
      %2784 = sbr.rel (%p2782) target = $region40
    $region39: #{cnn_layer3d_plain.1} parent=5 // pred_region
      %s2785 = ssub.s32 %s9, 2
      // Predicated region
      $region41: #{cnn_layer3d_plain.1} parent=39 // pred_check
        %p2786 = pneg %p126
      $region42: #{cnn_layer3d_plain.1} parent=39 // pred_check_branch
        %2788 = sbr.rel (%p2786) target = $region44
      $region43: #{cnn_layer3d_plain.1} parent=39 // pred_region
        %s2789 = smul.u32 %s20, 2
        %s2790 = sadd.s32 %s2789, %s21
        %p2791 = scmp.lt.s32.totalorder %s2790, 3
        %s2792 = scalar_select %p2791, %s2790, 3
        %s2793 = smul.addr %s2792, 32
        %s2794 = smul.addr %s2793, 8
        %s2795 = scalar_lea.vmem %s3, %s2794
      $region44: #{cnn_layer3d_plain.1} parent=39 // pred_fallthru
        _
    $region40: #{cnn_layer3d_plain.1} parent=5 // pred_fallthru
      _
  $region6: #{cnn_layer3d_plain.1} parent=0 // loop_footer
    %s13 = sadd.s32 1, %s9
  $region7: #{cnn_layer3d_plain.1} parent=0 // loop_footer_branch
    %8 = sbr.rel target = $region3
  $region8: #{cnn_layer3d_plain.1} parent=0 // loop_exit
    _

</llo_original>
